<compile_context>
chip_gen: v6e
topology: v6e:2x2x1
jax: 0.10.0
libtpu: 0.0.40
codegen_flags: <defaults>
</compile_context>

<pallas_src>
import functools

import jax
import jax.numpy as jnp
import numpy as np
from jax.experimental import pallas as pl
from jax.experimental.pallas import tpu as pltpu


# ----------------------------------------------------------------------------
# Deterministic parameter construction (kornia 1D Gaussian, float32 like kornia)
# ----------------------------------------------------------------------------
def _gaussian_taps_1d(sigma: int):
    """1D taps matching kornia get_gaussian_kernel1d(k, sigma), k = 4*sigma+1."""
    k = 4 * sigma + 1
    xs = np.arange(k, dtype=np.float32) - np.float32(k // 2)
    g = np.exp(-(xs * xs) / np.float32(2.0 * float(sigma) * float(sigma)))
    g = (g / g.sum()).astype(np.float32)
    return tuple(float(v) for v in g)  # compile-time Python constants


def _reflect_index(t: int, n: int) -> int:
    if t < 0:
        return -t
    if t > n - 1:
        return 2 * (n - 1) - t
    return t


def _reflect_band_matrix(n: int, taps) -> np.ndarray:
    """(n, n) matrix B so that (v @ B)[..., j] = 1D reflect-padded conv of v."""
    p = (len(taps) - 1) // 2
    B = np.zeros((n, n), dtype=np.float32)
    for j in range(n):
        for d in range(-p, p + 1):
            B[_reflect_index(j + d, n), j] += np.float32(taps[p + d])
    return B


# ----------------------------------------------------------------------------
# Fused Pallas kernel: identity channel + all sigmas
# ----------------------------------------------------------------------------
def _filter_augment_kernel(x_ref, b_ref, o_ref, xs_ref, *, taps, p_max, H, W):
    # x_ref : (Nb, H, W)            unpadded input block, VMEM
    # b_ref : (S, W, W)             compile-time reflect band matrices, VMEM
    # o_ref : (Nb, 1+S, H, W)       output block, VMEM
    # xs_ref: (Nb, H + 2*p_max, W)  f32 scratch: H-direction reflect halo
    Nb = x_ref.shape[0]

    # Channel 0: identity.
    o_ref[:, 0, :, :] = x_ref[...]

    # Build the H-direction reflect halo ONCE at p_max; shared by all sigmas.
    xs_ref[:, p_max:p_max + H, :] = x_ref[...].astype(jnp.float32)
    for r in range(p_max):  # p_max = 2*max(sigma): a handful of row copies
        xs_ref[:, p_max - 1 - r, :] = x_ref[:, r + 1, :].astype(jnp.float32)
        xs_ref[:, p_max + H + r, :] = x_ref[:, H - 2 - r, :].astype(jnp.float32)

    for s, g in enumerate(taps):  # static unroll over sigmas
        p = (len(g) - 1) // 2

        # Vertical 1D pass (VPU): symmetric taps folded, every window is a
        # lane-aligned sublane-offset load straight from the scratch Ref.
        acc_v = g[p] * xs_ref[:, p_max:p_max + H, :]
        for d in range(1, p + 1):  # static unroll, ceil(k/2) multiplies total
            acc_v = acc_v + g[p + d] * (
                xs_ref[:, p_max - d:p_max - d + H, :]
                + xs_ref[:, p_max + d:p_max + d + H, :]
            )

        # Horizontal 1D pass (MXU): reflect-banded matmul over the lane dim.
        y = jnp.dot(
            acc_v.reshape(Nb * H, W),
            b_ref[s],
            preferred_element_type=jnp.float32,
            precision=jax.lax.Precision.HIGHEST,
        )
        o_ref[:, 1 + s, :, :] = y.reshape(Nb, H, W).astype(o_ref.dtype)


# ----------------------------------------------------------------------------
# FilterAugment forward
# ----------------------------------------------------------------------------
def filter_augment(x: jax.Array, blurs) -> jax.Array:
    """x: (N, 1, H, W) -> (N, 1 + len(blurs), H, W)."""
    N, C, H, W = x.shape
    assert C == 1, "FilterAugment builds GaussianFilter(blur, channels=1)"
    sigmas = [int(s) for s in blurs]
    if not sigmas:
        return x

    taps = tuple(_gaussian_taps_1d(s) for s in sigmas)
    pads = [(len(g) - 1) // 2 for g in taps]
    p_max = max(pads)
    S = len(sigmas)
    Cout = 1 + S
    # Same constraint as ReflectionPad2d.
    assert p_max <= H - 1 and p_max <= W - 1, "reflect pad requires p <= dim-1"

    # Compile-time reflect band matrices for the horizontal (lane-dim) pass.
    b_stack = jnp.asarray(np.stack([_reflect_band_matrix(W, g) for g in taps]))

    # --- Batch-tile sizing: double-buffer aware, generation aware -----------
    itemsize = int(jnp.dtype(x.dtype).itemsize)
    per_row = (
        2 * H * W * itemsize              # input block (pipeline double-buffer)
        + 2 * Cout * H * W * itemsize     # output block (double-buffer)
        + (H + 2 * p_max) * W * 4         # halo scratch (f32, single buffer)
        + 4 * H * W * 4                   # live f32 temporaries (acc_v, dot in/out)
    )
    fixed = 2 * S * W * W * 4             # band matrices
    try:
        info = pltpu.get_tpu_info()
        vmem_physical = int(getattr(info, "vmem_capacity_bytes", 64 * 1024 * 1024))
    except Exception:  # interpret mode / older runtimes
        vmem_physical = 64 * 1024 * 1024
    # ~28 MiB on v7x (64 MiB physical), capped at 56 MiB on v5e/v6e (128 MiB).
    vmem_budget = min(int(vmem_physical * 0.45), 56 * 1024 * 1024)
    Nb = max(1, min(N, max(0, vmem_budget - fixed) // per_row))
    if N >= 2:
        # At least 2 parallel grid steps so both v7x TensorCores get work.
        Nb = min(Nb, pl.cdiv(N, 2))
    num_blocks = pl.cdiv(N, Nb)           # partial last block: OOB writes dropped
    vmem_limit = int(min(vmem_physical * 3 // 4, 112 * 1024 * 1024))
    # TODO(synk): for very large H*W, add spatial (H) tiling with a p_max halo
    # so a whole image is never required to fit in VMEM (relevant on v7x).

    kernel = functools.partial(
        _filter_augment_kernel, taps=taps, p_max=p_max, H=H, W=W
    )
    return pl.pallas_call(
        kernel,
        out_shape=jax.ShapeDtypeStruct((N, Cout, H, W), x.dtype),
        grid=(num_blocks,),
        in_specs=[
            pl.BlockSpec((Nb, H, W), lambda n: (n, 0, 0)),
            pl.BlockSpec((S, W, W), lambda n: (0, 0, 0)),
        ],
        out_specs=pl.BlockSpec((Nb, Cout, H, W), lambda n: (n, 0, 0, 0)),
        scratch_shapes=[pltpu.VMEM((Nb, H + 2 * p_max, W), jnp.float32)],
        compiler_params=pltpu.CompilerParams(
            dimension_semantics=("parallel",),
            vmem_limit_bytes=vmem_limit,
        ),
    )(x[:, 0], b_stack)


# ----------------------------------------------------------------------------
# Pure-JAX reference (independent check: reflect pad + full 2D kernel conv)
# ----------------------------------------------------------------------------
def _filter_augment_ref(x: jax.Array, blurs) -> jax.Array:
    outs = [x]
    for sigma in blurs:
        sigma = int(sigma)
        g = np.asarray(_gaussian_taps_1d(sigma), dtype=np.float32)
        w = jnp.asarray(np.outer(g, g).astype(np.float32))[None, None]  # (1,1,k,k)
        p = 2 * sigma
        xp = jnp.pad(x, ((0, 0), (0, 0), (p, p), (p, p)), mode="reflect")
        y = jax.lax.conv_general_dilated(
            xp, w, window_strides=(1, 1), padding="VALID",
            dimension_numbers=("NCHW", "OIHW", "NCHW"),
            precision=jax.lax.Precision.HIGHEST,
        )
        outs.append(y)
    return jnp.concatenate(outs, axis=1)


if __name__ == "__main__":
    key = jax.random.PRNGKey(0)
    N, C, H, W = 2, 1, 16, 16
    blurs = [1, 2]  # kernel sizes 5 and 9, reflection pads 2 and 4

    x = jax.random.normal(key, (N, C, H, W), dtype=jnp.float32)

    out = jax.block_until_ready(filter_augment(x, blurs))
    ref = jax.block_until_ready(_filter_augment_ref(x, blurs))

    assert out.shape == (N, 1 + len(blurs), H, W), out.shape
    np.testing.assert_allclose(np.asarray(out), np.asarray(ref),
                               rtol=1e-5, atol=1e-5)
    print("KERNEL_OK")
</pallas_src>

<mosaic_0001>
module attributes {stable_mosaic.version = 11 : i64} {
  func.func @_filter_augment_kernel(%arg0: i32, %arg1: memref<1x16x16xf32, #tpu.memory_space<vmem>>, %arg2: memref<2x16x16xf32, #tpu.memory_space<vmem>>, %arg3: memref<1x3x16x16xf32, #tpu.memory_space<vmem>>, %arg4: memref<1x24x16xf32, #tpu.memory_space<vmem>>) attributes {dimension_semantics = [#tpu.dimension_semantics<parallel>], iteration_bounds = array<i64: 2>, scalar_prefetch = 0 : i64, scratch_operands = 1 : i64, tpu.core_type = #tpu.core_type<tc>, window_params = [{transform_indices = @transform_0, window_bounds = array<i64: 1, 16, 16>}, {pipeline_mode = #tpu.pipeline_mode<synchronous>, transform_indices = @transform_1, window_bounds = array<i64: 2, 16, 16>}, {transform_indices = @transform_2, window_bounds = array<i64: 1, 3, 16, 16>}]} {
    %c0 = arith.constant 0 : index
    %c0_0 = arith.constant 0 : index
    %c0_1 = arith.constant 0 : index
    %0 = vector.load %arg1[%c0, %c0_0, %c0_1] : memref<1x16x16xf32, #tpu.memory_space<vmem>>, vector<1x16x16xf32>
    %c0_2 = arith.constant 0 : index
    %c0_3 = arith.constant 0 : index
    %c0_4 = arith.constant 0 : index
    %c0_5 = arith.constant 0 : index
    %1 = vector.load %arg3[%c0_2, %c0_3, %c0_4, %c0_5] : memref<1x3x16x16xf32, #tpu.memory_space<vmem>>, vector<1x1x16x16xf32>
    %2 = vector.shape_cast %1 : vector<1x1x16x16xf32> to vector<1x16x16xf32>
    %3 = vector.shape_cast %0 : vector<1x16x16xf32> to vector<1x1x16x16xf32>
    tpu.vector_store %arg3[%c0_2, %c0_3, %c0_4, %c0_5], %3 {strides = array<i32>} : memref<1x3x16x16xf32, #tpu.memory_space<vmem>>, vector<1x1x16x16xf32>,
    %c0_6 = arith.constant 0 : index
    %c0_7 = arith.constant 0 : index
    %c0_8 = arith.constant 0 : index
    %4 = vector.load %arg1[%c0_6, %c0_7, %c0_8] : memref<1x16x16xf32, #tpu.memory_space<vmem>>, vector<1x16x16xf32>
    %c0_9 = arith.constant 0 : index
    %c4 = arith.constant 4 : index
    %c0_10 = arith.constant 0 : index
    %5 = vector.load %arg4[%c0_9, %c4, %c0_10] : memref<1x24x16xf32, #tpu.memory_space<vmem>>, vector<1x16x16xf32>
    tpu.vector_store %arg4[%c0_9, %c4, %c0_10], %4 {strides = array<i32>} : memref<1x24x16xf32, #tpu.memory_space<vmem>>, vector<1x16x16xf32>,
    %c0_11 = arith.constant 0 : index
    %c1 = arith.constant 1 : index
    %c0_12 = arith.constant 0 : index
    %6 = vector.load %arg1[%c0_11, %c1, %c0_12] : memref<1x16x16xf32, #tpu.memory_space<vmem>>, vector<1x1x16xf32>
    %7 = vector.shape_cast %6 : vector<1x1x16xf32> to vector<1x16xf32>
    %c0_13 = arith.constant 0 : index
    %c3 = arith.constant 3 : index
    %c0_14 = arith.constant 0 : index
    %8 = vector.load %arg4[%c0_13, %c3, %c0_14] : memref<1x24x16xf32, #tpu.memory_space<vmem>>, vector<1x1x16xf32>
    %9 = vector.shape_cast %8 : vector<1x1x16xf32> to vector<1x16xf32>
    %10 = vector.shape_cast %7 : vector<1x16xf32> to vector<1x1x16xf32>
    tpu.vector_store %arg4[%c0_13, %c3, %c0_14], %10 {strides = array<i32>} : memref<1x24x16xf32, #tpu.memory_space<vmem>>, vector<1x1x16xf32>,
    %c0_15 = arith.constant 0 : index
    %c14 = arith.constant 14 : index
    %c0_16 = arith.constant 0 : index
    %11 = vector.load %arg1[%c0_15, %c14, %c0_16] : memref<1x16x16xf32, #tpu.memory_space<vmem>>, vector<1x1x16xf32>
    %12 = vector.shape_cast %11 : vector<1x1x16xf32> to vector<1x16xf32>
    %c0_17 = arith.constant 0 : index
    %c20 = arith.constant 20 : index
    %c0_18 = arith.constant 0 : index
    %13 = vector.load %arg4[%c0_17, %c20, %c0_18] : memref<1x24x16xf32, #tpu.memory_space<vmem>>, vector<1x1x16xf32>
    %14 = vector.shape_cast %13 : vector<1x1x16xf32> to vector<1x16xf32>
    %15 = vector.shape_cast %12 : vector<1x16xf32> to vector<1x1x16xf32>
    tpu.vector_store %arg4[%c0_17, %c20, %c0_18], %15 {strides = array<i32>} : memref<1x24x16xf32, #tpu.memory_space<vmem>>, vector<1x1x16xf32>,
    %c0_19 = arith.constant 0 : index
    %c2 = arith.constant 2 : index
    %c0_20 = arith.constant 0 : index
    %16 = vector.load %arg1[%c0_19, %c2, %c0_20] : memref<1x16x16xf32, #tpu.memory_space<vmem>>, vector<1x1x16xf32>
    %17 = vector.shape_cast %16 : vector<1x1x16xf32> to vector<1x16xf32>
    %c0_21 = arith.constant 0 : index
    %c2_22 = arith.constant 2 : index
    %c0_23 = arith.constant 0 : index
    %18 = vector.load %arg4[%c0_21, %c2_22, %c0_23] : memref<1x24x16xf32, #tpu.memory_space<vmem>>, vector<1x1x16xf32>
    %19 = vector.shape_cast %18 : vector<1x1x16xf32> to vector<1x16xf32>
    %20 = vector.shape_cast %17 : vector<1x16xf32> to vector<1x1x16xf32>
    tpu.vector_store %arg4[%c0_21, %c2_22, %c0_23], %20 {strides = array<i32>} : memref<1x24x16xf32, #tpu.memory_space<vmem>>, vector<1x1x16xf32>,
    %c0_24 = arith.constant 0 : index
    %c13 = arith.constant 13 : index
    %c0_25 = arith.constant 0 : index
    %21 = vector.load %arg1[%c0_24, %c13, %c0_25] : memref<1x16x16xf32, #tpu.memory_space<vmem>>, vector<1x1x16xf32>
    %22 = vector.shape_cast %21 : vector<1x1x16xf32> to vector<1x16xf32>
    %c0_26 = arith.constant 0 : index
    %c21 = arith.constant 21 : index
    %c0_27 = arith.constant 0 : index
    %23 = vector.load %arg4[%c0_26, %c21, %c0_27] : memref<1x24x16xf32, #tpu.memory_space<vmem>>, vector<1x1x16xf32>
    %24 = vector.shape_cast %23 : vector<1x1x16xf32> to vector<1x16xf32>
    %25 = vector.shape_cast %22 : vector<1x16xf32> to vector<1x1x16xf32>
    tpu.vector_store %arg4[%c0_26, %c21, %c0_27], %25 {strides = array<i32>} : memref<1x24x16xf32, #tpu.memory_space<vmem>>, vector<1x1x16xf32>,
    %c0_28 = arith.constant 0 : index
    %c3_29 = arith.constant 3 : index
    %c0_30 = arith.constant 0 : index
    %26 = vector.load %arg1[%c0_28, %c3_29, %c0_30] : memref<1x16x16xf32, #tpu.memory_space<vmem>>, vector<1x1x16xf32>
    %27 = vector.shape_cast %26 : vector<1x1x16xf32> to vector<1x16xf32>
    %c0_31 = arith.constant 0 : index
    %c1_32 = arith.constant 1 : index
    %c0_33 = arith.constant 0 : index
    %28 = vector.load %arg4[%c0_31, %c1_32, %c0_33] : memref<1x24x16xf32, #tpu.memory_space<vmem>>, vector<1x1x16xf32>
    %29 = vector.shape_cast %28 : vector<1x1x16xf32> to vector<1x16xf32>
    %30 = vector.shape_cast %27 : vector<1x16xf32> to vector<1x1x16xf32>
    tpu.vector_store %arg4[%c0_31, %c1_32, %c0_33], %30 {strides = array<i32>} : memref<1x24x16xf32, #tpu.memory_space<vmem>>, vector<1x1x16xf32>,
    %c0_34 = arith.constant 0 : index
    %c12 = arith.constant 12 : index
    %c0_35 = arith.constant 0 : index
    %31 = vector.load %arg1[%c0_34, %c12, %c0_35] : memref<1x16x16xf32, #tpu.memory_space<vmem>>, vector<1x1x16xf32>
    %32 = vector.shape_cast %31 : vector<1x1x16xf32> to vector<1x16xf32>
    %c0_36 = arith.constant 0 : index
    %c22 = arith.constant 22 : index
    %c0_37 = arith.constant 0 : index
    %33 = vector.load %arg4[%c0_36, %c22, %c0_37] : memref<1x24x16xf32, #tpu.memory_space<vmem>>, vector<1x1x16xf32>
    %34 = vector.shape_cast %33 : vector<1x1x16xf32> to vector<1x16xf32>
    %35 = vector.shape_cast %32 : vector<1x16xf32> to vector<1x1x16xf32>
    tpu.vector_store %arg4[%c0_36, %c22, %c0_37], %35 {strides = array<i32>} : memref<1x24x16xf32, #tpu.memory_space<vmem>>, vector<1x1x16xf32>,
    %c0_38 = arith.constant 0 : index
    %c4_39 = arith.constant 4 : index
    %c0_40 = arith.constant 0 : index
    %36 = vector.load %arg1[%c0_38, %c4_39, %c0_40] : memref<1x16x16xf32, #tpu.memory_space<vmem>>, vector<1x1x16xf32>
    %37 = vector.shape_cast %36 : vector<1x1x16xf32> to vector<1x16xf32>
    %c0_41 = arith.constant 0 : index
    %c0_42 = arith.constant 0 : index
    %c0_43 = arith.constant 0 : index
    %38 = vector.load %arg4[%c0_41, %c0_42, %c0_43] : memref<1x24x16xf32, #tpu.memory_space<vmem>>, vector<1x1x16xf32>
    %39 = vector.shape_cast %38 : vector<1x1x16xf32> to vector<1x16xf32>
    %40 = vector.shape_cast %37 : vector<1x16xf32> to vector<1x1x16xf32>
    tpu.vector_store %arg4[%c0_41, %c0_42, %c0_43], %40 {strides = array<i32>} : memref<1x24x16xf32, #tpu.memory_space<vmem>>, vector<1x1x16xf32>,
    %c0_44 = arith.constant 0 : index
    %c11 = arith.constant 11 : index
    %c0_45 = arith.constant 0 : index
    %41 = vector.load %arg1[%c0_44, %c11, %c0_45] : memref<1x16x16xf32, #tpu.memory_space<vmem>>, vector<1x1x16xf32>
    %42 = vector.shape_cast %41 : vector<1x1x16xf32> to vector<1x16xf32>
    %c0_46 = arith.constant 0 : index
    %c23 = arith.constant 23 : index
    %c0_47 = arith.constant 0 : index
    %43 = vector.load %arg4[%c0_46, %c23, %c0_47] : memref<1x24x16xf32, #tpu.memory_space<vmem>>, vector<1x1x16xf32>
    %44 = vector.shape_cast %43 : vector<1x1x16xf32> to vector<1x16xf32>
    %45 = vector.shape_cast %42 : vector<1x16xf32> to vector<1x1x16xf32>
    tpu.vector_store %arg4[%c0_46, %c23, %c0_47], %45 {strides = array<i32>} : memref<1x24x16xf32, #tpu.memory_space<vmem>>, vector<1x1x16xf32>,
    %c0_48 = arith.constant 0 : index
    %c4_49 = arith.constant 4 : index
    %c0_50 = arith.constant 0 : index
    %46 = vector.load %arg4[%c0_48, %c4_49, %c0_50] : memref<1x24x16xf32, #tpu.memory_space<vmem>>, vector<1x16x16xf32>
    %cst = arith.constant 0.402619958 : f32
    %47 = vector.broadcast %cst : f32 to vector<1x16x16xf32>
    %48 = arith.mulf %47, %46 : vector<1x16x16xf32>
    %c0_51 = arith.constant 0 : index
    %c3_52 = arith.constant 3 : index
    %c0_53 = arith.constant 0 : index
    %49 = vector.load %arg4[%c0_51, %c3_52, %c0_53] : memref<1x24x16xf32, #tpu.memory_space<vmem>>, vector<1x16x16xf32>
    %c0_54 = arith.constant 0 : index
    %c5 = arith.constant 5 : index
    %c0_55 = arith.constant 0 : index
    %50 = vector.load %arg4[%c0_54, %c5, %c0_55] : memref<1x24x16xf32, #tpu.memory_space<vmem>>, vector<1x16x16xf32>
    %51 = arith.addf %49, %50 : vector<1x16x16xf32>
    %cst_56 = arith.constant 0.244201362 : f32
    %52 = vector.broadcast %cst_56 : f32 to vector<1x16x16xf32>
    %53 = arith.mulf %52, %51 : vector<1x16x16xf32>
    %54 = arith.addf %48, %53 : vector<1x16x16xf32>
    %c0_57 = arith.constant 0 : index
    %c2_58 = arith.constant 2 : index
    %c0_59 = arith.constant 0 : index
    %55 = vector.load %arg4[%c0_57, %c2_58, %c0_59] : memref<1x24x16xf32, #tpu.memory_space<vmem>>, vector<1x16x16xf32>
    %c0_60 = arith.constant 0 : index
    %c6 = arith.constant 6 : index
    %c0_61 = arith.constant 0 : index
    %56 = vector.load %arg4[%c0_60, %c6, %c0_61] : memref<1x24x16xf32, #tpu.memory_space<vmem>>, vector<1x16x16xf32>
    %57 = arith.addf %55, %56 : vector<1x16x16xf32>
    %cst_62 = arith.constant 0.0544886887 : f32
    %58 = vector.broadcast %cst_62 : f32 to vector<1x16x16xf32>
    %59 = arith.mulf %58, %57 : vector<1x16x16xf32>
    %60 = arith.addf %54, %59 : vector<1x16x16xf32>
    %61 = vector.shape_cast %60 : vector<1x16x16xf32> to vector<16x16xf32>
    %c0_63 = arith.constant 0 : index
    %c0_64 = arith.constant 0 : index
    %c0_65 = arith.constant 0 : index
    %62 = vector.load %arg2[%c0_63, %c0_64, %c0_65] : memref<2x16x16xf32, #tpu.memory_space<vmem>>, vector<1x16x16xf32>
    %63 = vector.shape_cast %62 : vector<1x16x16xf32> to vector<16x16xf32>
    %cst_66 = arith.constant dense<0.000000e+00> : vector<16x16xf32>
    %64 = tpu.matmul %61, %63, %cst_66 {dimension_numbers = #tpu.dot_dimension_numbers<[1], [0], [0], [1], [0, 0, 1, 1], [], []>, precision = #tpu.contract_precision<fp32>} : vector<16x16xf32>, vector<16x16xf32>, vector<16x16xf32> -> vector<16x16xf32>
    %65 = vector.shape_cast %64 : vector<16x16xf32> to vector<1x16x16xf32>
    %c0_67 = arith.constant 0 : index
    %c1_68 = arith.constant 1 : index
    %c0_69 = arith.constant 0 : index
    %c0_70 = arith.constant 0 : index
    %66 = vector.load %arg3[%c0_67, %c1_68, %c0_69, %c0_70] : memref<1x3x16x16xf32, #tpu.memory_space<vmem>>, vector<1x1x16x16xf32>
    %67 = vector.shape_cast %66 : vector<1x1x16x16xf32> to vector<1x16x16xf32>
    %68 = vector.shape_cast %65 : vector<1x16x16xf32> to vector<1x1x16x16xf32>
    tpu.vector_store %arg3[%c0_67, %c1_68, %c0_69, %c0_70], %68 {strides = array<i32>} : memref<1x3x16x16xf32, #tpu.memory_space<vmem>>, vector<1x1x16x16xf32>,
    %c0_71 = arith.constant 0 : index
    %c4_72 = arith.constant 4 : index
    %c0_73 = arith.constant 0 : index
    %69 = vector.load %arg4[%c0_71, %c4_72, %c0_73] : memref<1x24x16xf32, #tpu.memory_space<vmem>>, vector<1x16x16xf32>
    %cst_74 = arith.constant 0.204163685 : f32
    %70 = vector.broadcast %cst_74 : f32 to vector<1x16x16xf32>
    %71 = arith.mulf %70, %69 : vector<1x16x16xf32>
    %c0_75 = arith.constant 0 : index
    %c3_76 = arith.constant 3 : index
    %c0_77 = arith.constant 0 : index
    %72 = vector.load %arg4[%c0_75, %c3_76, %c0_77] : memref<1x24x16xf32, #tpu.memory_space<vmem>>, vector<1x16x16xf32>
    %c0_78 = arith.constant 0 : index
    %c5_79 = arith.constant 5 : index
    %c0_80 = arith.constant 0 : index
    %73 = vector.load %arg4[%c0_78, %c5_79, %c0_80] : memref<1x24x16xf32, #tpu.memory_space<vmem>>, vector<1x16x16xf32>
    %74 = arith.addf %72, %73 : vector<1x16x16xf32>
    %cst_81 = arith.constant 0.180173814 : f32
    %75 = vector.broadcast %cst_81 : f32 to vector<1x16x16xf32>
    %76 = arith.mulf %75, %74 : vector<1x16x16xf32>
    %77 = arith.addf %71, %76 : vector<1x16x16xf32>
    %c0_82 = arith.constant 0 : index
    %c2_83 = arith.constant 2 : index
    %c0_84 = arith.constant 0 : index
    %78 = vector.load %arg4[%c0_82, %c2_83, %c0_84] : memref<1x24x16xf32, #tpu.memory_space<vmem>>, vector<1x16x16xf32>
    %c0_85 = arith.constant 0 : index
    %c6_86 = arith.constant 6 : index
    %c0_87 = arith.constant 0 : index
    %79 = vector.load %arg4[%c0_85, %c6_86, %c0_87] : memref<1x24x16xf32, #tpu.memory_space<vmem>>, vector<1x16x16xf32>
    %80 = arith.addf %78, %79 : vector<1x16x16xf32>
    %cst_88 = arith.constant 0.123831533 : f32
    %81 = vector.broadcast %cst_88 : f32 to vector<1x16x16xf32>
    %82 = arith.mulf %81, %80 : vector<1x16x16xf32>
    %83 = arith.addf %77, %82 : vector<1x16x16xf32>
    %c0_89 = arith.constant 0 : index
    %c1_90 = arith.constant 1 : index
    %c0_91 = arith.constant 0 : index
    %84 = vector.load %arg4[%c0_89, %c1_90, %c0_91] : memref<1x24x16xf32, #tpu.memory_space<vmem>>, vector<1x16x16xf32>
    %c0_92 = arith.constant 0 : index
    %c7 = arith.constant 7 : index
    %c0_93 = arith.constant 0 : index
    %85 = vector.load %arg4[%c0_92, %c7, %c0_93] : memref<1x24x16xf32, #tpu.memory_space<vmem>>, vector<1x16x16xf32>
    %86 = arith.addf %84, %85 : vector<1x16x16xf32>
    %cst_94 = arith.constant 0.0662822351 : f32
    %87 = vector.broadcast %cst_94 : f32 to vector<1x16x16xf32>
    %88 = arith.mulf %87, %86 : vector<1x16x16xf32>
    %89 = arith.addf %83, %88 : vector<1x16x16xf32>
    %c0_95 = arith.constant 0 : index
    %c0_96 = arith.constant 0 : index
    %c0_97 = arith.constant 0 : index
    %90 = vector.load %arg4[%c0_95, %c0_96, %c0_97] : memref<1x24x16xf32, #tpu.memory_space<vmem>>, vector<1x16x16xf32>
    %c0_98 = arith.constant 0 : index
    %c8 = arith.constant 8 : index
    %c0_99 = arith.constant 0 : index
    %91 = vector.load %arg4[%c0_98, %c8, %c0_99] : memref<1x24x16xf32, #tpu.memory_space<vmem>>, vector<1x16x16xf32>
    %92 = arith.addf %90, %91 : vector<1x16x16xf32>
    %cst_100 = arith.constant 0.0276305489 : f32
    %93 = vector.broadcast %cst_100 : f32 to vector<1x16x16xf32>
    %94 = arith.mulf %93, %92 : vector<1x16x16xf32>
    %95 = arith.addf %89, %94 : vector<1x16x16xf32>
    %96 = vector.shape_cast %95 : vector<1x16x16xf32> to vector<16x16xf32>
    %c1_101 = arith.constant 1 : index
    %c0_102 = arith.constant 0 : index
    %c0_103 = arith.constant 0 : index
    %97 = vector.load %arg2[%c1_101, %c0_102, %c0_103] : memref<2x16x16xf32, #tpu.memory_space<vmem>>, vector<1x16x16xf32>
    %98 = vector.shape_cast %97 : vector<1x16x16xf32> to vector<16x16xf32>
    %cst_104 = arith.constant dense<0.000000e+00> : vector<16x16xf32>
    %99 = tpu.matmul %96, %98, %cst_104 {dimension_numbers = #tpu.dot_dimension_numbers<[1], [0], [0], [1], [0, 0, 1, 1], [], []>, precision = #tpu.contract_precision<fp32>} : vector<16x16xf32>, vector<16x16xf32>, vector<16x16xf32> -> vector<16x16xf32>
    %100 = vector.shape_cast %99 : vector<16x16xf32> to vector<1x16x16xf32>
    %c0_105 = arith.constant 0 : index
    %c2_106 = arith.constant 2 : index
    %c0_107 = arith.constant 0 : index
    %c0_108 = arith.constant 0 : index
    %101 = vector.load %arg3[%c0_105, %c2_106, %c0_107, %c0_108] : memref<1x3x16x16xf32, #tpu.memory_space<vmem>>, vector<1x1x16x16xf32>
    %102 = vector.shape_cast %101 : vector<1x1x16x16xf32> to vector<1x16x16xf32>
    %103 = vector.shape_cast %100 : vector<1x16x16xf32> to vector<1x1x16x16xf32>
    tpu.vector_store %arg3[%c0_105, %c2_106, %c0_107, %c0_108], %103 {strides = array<i32>} : memref<1x3x16x16xf32, #tpu.memory_space<vmem>>, vector<1x1x16x16xf32>,
    return
  }
  func.func @transform_0(%arg0: i32) -> (i32, i32, i32) {
    %c0_i32 = arith.constant 0 : i32
    %c0_i32_0 = arith.constant 0 : i32
    %c0_i32_1 = arith.constant 0 : i32
    return %arg0, %c0_i32, %c0_i32_0 : i32, i32, i32
  }
  func.func @transform_1(%arg0: i32) -> (i32, i32, i32) {
    %c0_i32 = arith.constant 0 : i32
    %c0_i32_0 = arith.constant 0 : i32
    %c0_i32_1 = arith.constant 0 : i32
    %c0_i32_2 = arith.constant 0 : i32
    return %c0_i32, %c0_i32_0, %c0_i32_1 : i32, i32, i32
  }
  func.func @transform_2(%arg0: i32) -> (i32, i32, i32, i32) {
    %c0_i32 = arith.constant 0 : i32
    %c0_i32_0 = arith.constant 0 : i32
    %c0_i32_1 = arith.constant 0 : i32
    %c0_i32_2 = arith.constant 0 : i32
    return %arg0, %c0_i32, %c0_i32_0, %c0_i32_1 : i32, i32, i32, i32
  }
}

</mosaic_0001>

<llo_original>
// kernel: tpu_custom_call.1
$region0: #{tpu_custom_call.1}
  #allocation0 [shape = 'u32[]', space=smem, size = 0x4, offset = 0x4, fixed_abs, tag = 'smem constant byte address 0x4 - core index']
  #allocation1 [shape = 'u32[144,128]{1,0:T(1,128)}', space=vmem, size = 0x12000, scoped, tag = 'internal scratch']
  #allocation2 [shape = 'f32[1,24,16]{2,1,0:T(8,128)}', space=vmem, size = 0x3000, scoped, tag = 'scratch operand']
  %s0 = inlined_call_operand.hbm [shape: f32[2,16,16], index: 0, kind: input, shape index: {}]
  %s1 = inlined_call_operand.hbm [shape: f32[2,16,16], index: 1, kind: input, shape index: {}]
  %s2 = inlined_call_operand.hbm [shape: f32[2,3,16,16], index: 2, kind: output, shape index: {}]
  %s3 = sld [smem:[#allocation0]]
  $region49: #{tpu_custom_call.1} parent=0
    _
  %s5 = ssub.s32 1, %s3
  %s6 = scalar_select 0, %s5, %s3
  $region1: #{tpu_custom_call.1} parent=0
    #allocation3 [shape = 'u8[16384]{0}', space=vmem, size = 0x4000, scoped, tag = 'input window, operand 0']
    #allocation4 [shape = 's32[2]{0}', space=sflag, size = 0x8, scoped, tag = 'scoped memory for tpu_custom_call.1']
    #allocation5 [shape = 's32[2]{0}', space=sflag, size = 0x8, scoped, tag = 'scoped memory for tpu_custom_call.1']
    #allocation6 [shape = 'u8[16384]{0}', space=vmem, size = 0x4000, scoped, tag = 'input window, operand 1, single buffered']
    #allocation7 [shape = 's32[1]{0}', space=sflag, size = 0x4, scoped, tag = 'scoped memory for tpu_custom_call.1']
    #allocation8 [shape = 'u8[49152]{0}', space=vmem, size = 0xc000, scoped, tag = 'output window, operand 0']
    %7 = vsyncpa [#allocation4], 0
    %s8 = scalar_lea.sflag [#allocation4], 1
    %9 = vsyncpa %s8, 0
    %10 = vsyncpa [#allocation7], 0
    %11 = vsyncpa [#allocation5], 0
    %s12 = scalar_lea.sflag [#allocation5], 1
    %13 = vsyncpa %s12, 0
    loop: start=0, step=1, limit=4
    $region2: #{tpu_custom_call.1} parent=1 // loop_pre_header
      _
    $region3: #{tpu_custom_call.1} parent=1 // loop_header
      %s15 = sphi 0, %s19
      %p16 = scmp.ge.s32.totalorder %s15, 4
      %s25 = sphi 0, %s27
      %s28 = sphi 0, %s25
      %s29 = sphi 0, %s28
      %s45 = sphi 0, %s29
      %s49 = sphi 0, %s49
      %s51 = sphi 0, %s49
      %s52 = sphi 0, %s51
      %s66 = sphi 0, %s52
      %s72 = sphi 0, %s74
      %s75 = sphi 0, %s72
      %s76 = sphi 0, %s75
      %s92 = sphi 0, %s76
    $region4: #{tpu_custom_call.1} parent=1 // loop_header_branch
      %18 = sbr.rel (%p16) target = $region8
    $region5: #{tpu_custom_call.1} parent=1 // loop_body
      %s20 = ssub.s32 %s15, 1
      %s21 = ssub.s32 %s15, 2
      %s22 = sadd.s32 %s15, 1
      %s23 = ssub.s32 %s15, %s22
      %p24 = scmp.eq.s32.totalorder %s23, 0
      %s26 = sadd.s32 %s25, 1
      %s27 = scalar_select %p24, %s25, %s26
      %p30 = pneg %p24
      %p31 = scmp.eq.s32.totalorder %s15, 1
      %p32 = por %p30, %p31
      %p33 = scmp.ne.s32.totalorder %s25, %s28
      %p34 = scmp.eq.s32.totalorder %s15, 0
      %p35 = por %p33, %p34
      %p36 = scmp.ne.s32.totalorder %s25, %s28
      %p37 = scmp.eq.s32.totalorder %s20, 1
      %p38 = por %p36, %p37
      %p39 = scmp.ne.s32.totalorder %s28, %s29
      %p40 = scmp.eq.s32.totalorder %s20, 0
      %p41 = por %p39, %p40
      %p42 = scmp.ne.s32.totalorder %s28, %s29
      %p43 = scmp.eq.s32.totalorder %s21, 1
      %p44 = por %p42, %p43
      %p46 = scmp.ne.s32.totalorder %s29, %s45
      %p47 = scmp.eq.s32.totalorder %s21, 0
      %p48 = por %p46, %p47
      %s50 = sadd.s32 %s49, 1
      %p53 = scmp.eq.s32.totalorder %s15, 1
      %p54 = scmp.ne.s32.totalorder %s49, %s51
      %p55 = scmp.eq.s32.totalorder %s15, 0
      %p56 = por %p54, %p55
      %p57 = scmp.ne.s32.totalorder %s49, %s51
      %p58 = scmp.eq.s32.totalorder %s20, 1
      %p59 = por %p57, %p58
      %p60 = scmp.ne.s32.totalorder %s51, %s52
      %p61 = scmp.eq.s32.totalorder %s20, 0
      %p62 = por %p60, %p61
      %p63 = scmp.ne.s32.totalorder %s51, %s52
      %p64 = scmp.eq.s32.totalorder %s21, 1
      %p65 = por %p63, %p64
      %p67 = scmp.ne.s32.totalorder %s52, %s66
      %p68 = scmp.eq.s32.totalorder %s21, 0
      %p69 = por %p67, %p68
      %s70 = ssub.s32 %s15, %s22
      %p71 = scmp.eq.s32.totalorder %s70, 0
      %s73 = sadd.s32 %s72, 1
      %s74 = scalar_select %p71, %s72, %s73
      %p77 = pneg %p71
      %p78 = scmp.eq.s32.totalorder %s15, 1
      %p79 = por %p77, %p78
      %p80 = scmp.ne.s32.totalorder %s72, %s75
      %p81 = scmp.eq.s32.totalorder %s15, 0
      %p82 = por %p80, %p81
      %p83 = scmp.ne.s32.totalorder %s72, %s75
      %p84 = scmp.eq.s32.totalorder %s20, 1
      %p85 = por %p83, %p84
      %p86 = scmp.ne.s32.totalorder %s75, %s76
      %p87 = scmp.eq.s32.totalorder %s20, 0
      %p88 = por %p86, %p87
      %p89 = scmp.ne.s32.totalorder %s75, %s76
      %p90 = scmp.eq.s32.totalorder %s21, 1
      %p91 = por %p89, %p90
      %p93 = scmp.ne.s32.totalorder %s76, %s92
      %p94 = scmp.eq.s32.totalorder %s21, 0
      %p95 = por %p93, %p94
      %p96 = scmp.le.s32.totalorder 1, %s15
      %p97 = scmp.lt.s32.totalorder %s15, 3
      %p98 = pnand %p96, %p97
      %p99 = pneg %p98
      // Predicated region
      $region9: #{tpu_custom_call.1} parent=5 // pred_check
        _
      $region10: #{tpu_custom_call.1} parent=5 // pred_check_branch
        %101 = sbr.rel (%p98) target = $region12
      $region11: #{tpu_custom_call.1} parent=5 // pred_region
        %s102 = ssub.s32 %s15, 1
        // Predicated region
        $region13: #{tpu_custom_call.1} parent=11 // pred_check
          %p103 = pneg %p62
        $region14: #{tpu_custom_call.1} parent=11 // pred_check_branch
          %105 = sbr.rel (%p103) target = $region16
        $region15: #{tpu_custom_call.1} parent=11 // pred_region
          %s107 = ssub.s32 512, 512
          %108 = vsyncadd [#allocation7], %s107
          %s109 = sshll.u32 [#allocation6], 4
          %s110 = int_to_ptr.vmem [resolvable:$true] %s109
          %115 = dma.hbm_to_vmem [thread:$0]  %s1, 512, %s110, [#allocation7], 128, 128, 8
        $region16: #{tpu_custom_call.1} parent=11 // pred_fallthru
          _
      $region12: #{tpu_custom_call.1} parent=5 // pred_fallthru
        _
      %p116 = scmp.lt.s32.totalorder %s15, 2
      // Predicated region
      $region17: #{tpu_custom_call.1} parent=5 // pred_check
        %p117 = pneg %p116
      $region18: #{tpu_custom_call.1} parent=5 // pred_check_branch
        %119 = sbr.rel (%p117) target = $region20
      $region19: #{tpu_custom_call.1} parent=5 // pred_region
        // Predicated region
        $region21: #{tpu_custom_call.1} parent=19 // pred_check
          %p120 = pneg %p35
        $region22: #{tpu_custom_call.1} parent=19 // pred_check_branch
          %122 = sbr.rel (%p120) target = $region24
        $region23: #{tpu_custom_call.1} parent=19 // pred_region
          %s123 = sand.u32 %s25, 1
          %s124 = scalar_lea.sflag [#allocation4], %s123
          %s125 = sand.u32 %s25, 1
          %s126 = smul.addr %s125, 16
          %s127 = scalar_lea.vmem [#allocation3], %s126
          %s129 = ssub.s32 256, 256
          %130 = vsyncadd %s124, %s129
          %s131 = smul.addr %s15, 2
          %s132 = smul.addr %s131, 128
          %s133 = scalar_lea.hbm %s0, %s132
          %s134 = sshll.u32 %s127, 4
          %s135 = int_to_ptr.vmem [resolvable:$true] %s134
          %140 = dma.hbm_to_vmem [thread:$0]  %s133, 256, %s135, %s124, 128, 128, 8
        $region24: #{tpu_custom_call.1} parent=19 // pred_fallthru
          _
      $region20: #{tpu_custom_call.1} parent=5 // pred_fallthru
        _
      %p141 = scmp.le.s32.totalorder 1, %s15
      %p142 = scmp.lt.s32.totalorder %s15, 3
      %p143 = pnand %p141, %p142
      %p144 = pneg %p143
      // Predicated region
      $region25: #{tpu_custom_call.1} parent=5 // pred_check
        _
      $region26: #{tpu_custom_call.1} parent=5 // pred_check_branch
        %146 = sbr.rel (%p143) target = $region28
      $region27: #{tpu_custom_call.1} parent=5 // pred_region
        %s147 = ssub.s32 %s15, 1
        %s148 = sand.u32 %s28, 1
        %s149 = scalar_lea.sflag [#allocation4], %s148
        %s150 = sand.u32 %s28, 1
        %s151 = smul.addr %s150, 16
        %s152 = scalar_lea.vmem [#allocation3], %s151
        // Predicated region
        $region29: #{tpu_custom_call.1} parent=27 // pred_check
          %p153 = pneg %p41
        $region30: #{tpu_custom_call.1} parent=27 // pred_check_branch
          %155 = sbr.rel (%p153) target = $region32
        $region31: #{tpu_custom_call.1} parent=27 // pred_region
          %156 = dma.done %s149, 256
        $region32: #{tpu_custom_call.1} parent=27 // pred_fallthru
          _
        // Predicated region
        $region33: #{tpu_custom_call.1} parent=27 // pred_check
          %p157 = pneg %p62
        $region34: #{tpu_custom_call.1} parent=27 // pred_check_branch
          %159 = sbr.rel (%p157) target = $region36
        $region35: #{tpu_custom_call.1} parent=27 // pred_region
          %160 = dma.done [#allocation7], 512
        $region36: #{tpu_custom_call.1} parent=27 // pred_fallthru
          _
        %s161 = sand.u32 %s28, 1
        %s162 = scalar_lea.sflag [#allocation4], %s161
        %s163 = sand.u32 %s28, 1
        %s164 = smul.addr %s163, 16
        %s165 = scalar_lea.vmem [#allocation3], %s164
        %p166 = pneg %p41
        %p167 = pneg %p38
        %p168 = pneg %p62
        %p169 = pneg %p59
        %p170 = pneg %p88
        %p171 = pneg %p85
        %s172 = sand.u32 %s75, 1
        %s173 = scalar_lea.sflag [#allocation5], %s172
        %s174 = sand.u32 %s75, 1
        %s175 = smul.addr %s174, 48
        %s176 = scalar_lea.vmem [#allocation8], %s175
        %v177 = vld [vmem:[%s152] sm:$0xff]
        %v178 = vld [vmem:[%s152 + $0x8] sm:$0xff]
        %vm179 = vcmask 130048
        %180 = vst.msk [vmem:[%s176] sm:$0xff] %vm179, %v177
        %181 = vst.msk [vmem:[%s176 + $0x8] sm:$0xff] %vm179, %v178
        %v182 = vld [vmem:[%s152] sm:$0xff]
        %v183 = vld [vmem:[%s152 + $0x8] sm:$0xff]
        %184 = vst.msk [vmem:[#allocation2 + $0x4] sm:$0xff] %vm179, %v182
        %185 = vst.msk [vmem:[#allocation2 + $0xc] sm:$0xff] %vm179, %v183
        %v186 = vld [vmem:[%s152 + $0x1] sm:$0x1]
        %vm187 = vcmask 122880
        %188 = vst.msk [vmem:[#allocation2 + $0x3] sm:$0x1] %vm187, %v186
        %v189 = vld [vmem:[%s152 + $0xe] sm:$0x1]
        %190 = vst.msk [vmem:[#allocation2 + $0x14] sm:$0x1] %vm187, %v189
        %v191 = vld [vmem:[%s152 + $0x2] sm:$0x1]
        %192 = vst.msk [vmem:[#allocation2 + $0x2] sm:$0x1] %vm187, %v191
        %v193 = vld [vmem:[%s152 + $0xd] sm:$0x1]
        %194 = vst.msk [vmem:[#allocation2 + $0x15] sm:$0x1] %vm187, %v193
        %v195 = vld [vmem:[%s152 + $0x3] sm:$0x1]
        %196 = vst.msk [vmem:[#allocation2 + $0x1] sm:$0x1] %vm187, %v195
        %v197 = vld [vmem:[%s152 + $0xc] sm:$0x1]
        %198 = vst.msk [vmem:[#allocation2 + $0x16] sm:$0x1] %vm187, %v197
        %v199 = vld [vmem:[%s152 + $0x4] sm:$0x1]
        %200 = vst.msk [vmem:[#allocation2] sm:$0x1] %vm187, %v199
        %v201 = vld [vmem:[%s152 + $0xb] sm:$0x1]
        %202 = vst.msk [vmem:[#allocation2 + $0x17] sm:$0x1] %vm187, %v201
        %v203 = vld [vmem:[#allocation2 + $0x4] sm:$0xff]
        %v204 = vld [vmem:[#allocation2 + $0xc] sm:$0xff]
        %v205 = vmul.f32 %v203, 0.40261996
        %v206 = vmul.f32 %v204, 0.40261996
        %v207 = vld [vmem:[#allocation2 + $0x3] sm:$0xff]
        %v208 = vld [vmem:[#allocation2 + $0xb] sm:$0xff]
        %v209 = vld [vmem:[#allocation2 + $0x5] sm:$0xff]
        %v210 = vld [vmem:[#allocation2 + $0xd] sm:$0xff]
        %v211 = vadd.f32 %v207, %v209
        %v212 = vadd.f32 %v208, %v210
        %v213 = vmul.f32 %v211, 0.24420136
        %v214 = vmul.f32 %v212, 0.24420136
        %v215 = vadd.f32 %v205, %v213
        %v216 = vadd.f32 %v206, %v214
        %v217 = vld [vmem:[#allocation2 + $0x2] sm:$0xff]
        %v218 = vld [vmem:[#allocation2 + $0xa] sm:$0xff]
        %v219 = vld [vmem:[#allocation2 + $0x6] sm:$0xff]
        %v220 = vld [vmem:[#allocation2 + $0xe] sm:$0xff]
        %v221 = vadd.f32 %v217, %v219
        %v222 = vadd.f32 %v218, %v220
        %v223 = vmul.f32 %v221, 0.05448869
        %v224 = vmul.f32 %v222, 0.05448869
        %v225 = vadd.f32 %v215, %v223
        %v226 = vadd.f32 %v216, %v224
        %v227 = vld [vmem:[#allocation6] sm:$0xff]
        %v228 = vld [vmem:[#allocation6 + $0x8] sm:$0xff]
        %v230 = vsel %vm179, %v225, 0
        %v233 = vsel %vm179, %v226, 0
        %235 = vmatprep.subr.mxu0 0.0
        %236 = vmatpush1.msra.mxu0 0.0
        %237 = vmatprep.subr.mxu0 0.0
        %238 = vmatpush1.msra.mxu0 0.0
        %239 = vmatprep.subr.mxu0 0.0
        %240 = vmatpush1.msra.mxu0 0.0
        %241 = vmatprep.subr.mxu0 0.0
        %242 = vmatpush1.msra.mxu0 0.0
        %243 = vmatprep.subr.mxu0 0.0
        %244 = vmatpush1.msra.mxu0 0.0
        %245 = vmatprep.subr.mxu0 0.0
        %246 = vmatpush1.msra.mxu0 0.0
        %247 = vmatprep.subr.mxu0 0.0
        %248 = vmatpush1.msra.mxu0 0.0
        %249 = vmatprep.subr.mxu0 0.0
        %250 = vmatpush1.msra.mxu0 0.0
        %251 = vmatprep.subr.mxu0 0.0
        %252 = vmatpush1.msra.mxu0 0.0
        %253 = vmatprep.subr.mxu0 0.0
        %254 = vmatpush1.msra.mxu0 0.0
        %255 = vmatprep.subr.mxu0 0.0
        %256 = vmatpush1.msra.mxu0 0.0
        %257 = vmatprep.subr.mxu0 0.0
        %258 = vmatpush1.msra.mxu0 0.0
        %259 = vmatprep.subr.mxu0 0.0
        %260 = vmatpush1.msra.mxu0 0.0
        %261 = vmatprep.subr.mxu0 0.0
        %262 = vmatpush1.msra.mxu0 0.0
        %263 = vmatprep.subr.mxu0 0.0
        %v264 = vand.u32 %v228, 4294901760
        %265 = vmatpush1.msra.mxu0 %v264
        %266 = vmatprep.subr.mxu0 0.0
        %v267 = vand.u32 %v227, 4294901760
        %268 = vmatpush1.msra.mxu0 %v267
        %269 = vmatprep.subr.mxu0 0.0
        %270 = vmatpush2.msra.mxu0 0.0
        %271 = vmatprep.subr.mxu0 0.0
        %272 = vmatpush2.msra.mxu0 0.0
        %273 = vmatprep.subr.mxu0 0.0
        %274 = vmatpush2.msra.mxu0 0.0
        %275 = vmatprep.subr.mxu0 0.0
        %276 = vmatpush2.msra.mxu0 0.0
        %277 = vmatprep.subr.mxu0 0.0
        %278 = vmatpush2.msra.mxu0 0.0
        %279 = vmatprep.subr.mxu0 0.0
        %280 = vmatpush2.msra.mxu0 0.0
        %281 = vmatprep.subr.mxu0 0.0
        %282 = vmatpush2.msra.mxu0 0.0
        %283 = vmatprep.subr.mxu0 0.0
        %284 = vmatpush2.msra.mxu0 0.0
        %285 = vmatprep.subr.mxu0 0.0
        %286 = vmatpush2.msra.mxu0 0.0
        %287 = vmatprep.subr.mxu0 0.0
        %288 = vmatpush2.msra.mxu0 0.0
        %289 = vmatprep.subr.mxu0 0.0
        %290 = vmatpush2.msra.mxu0 0.0
        %291 = vmatprep.subr.mxu0 0.0
        %292 = vmatpush2.msra.mxu0 0.0
        %293 = vmatprep.subr.mxu0 0.0
        %294 = vmatpush2.msra.mxu0 0.0
        %295 = vmatprep.subr.mxu0 0.0
        %296 = vmatpush2.msra.mxu0 0.0
        %297 = vmatprep.subr.mxu0 0.0
        %298 = vmatpush2.msra.mxu0 0.0
        %299 = vmatprep.subr.mxu0 0.0
        %300 = vmatpush2.msra.mxu0 0.0
        %301 = vmatprep.mubr.f32.mxu0 0.0
        %v302 = vand.u32 %v230, 4294901760
        %v303 = vsub.f32 %v230, %v302
        %v304 = vand.u32 %v303, 4294901760
        %v305 = vsub.f32 %v303, %v304
        %v306 = vand.u32 %v305, 4294901760
        %307 = vmatmul.mubr.f32.gmra.mxu0 %v306
        %v308 = vpop.f32.mrf.mxu0
        %v309 = vadd.f32 0.0, %v308
        %v310 = vpop.f32.mrf.mxu0
        %311 = vmatprep.mubr.f32.mxu0 0.0
        %v312 = vand.u32 %v233, 4294901760
        %v313 = vsub.f32 %v233, %v312
        %v314 = vand.u32 %v313, 4294901760
        %v315 = vsub.f32 %v313, %v314
        %v316 = vand.u32 %v315, 4294901760
        %317 = vmatmul.mubr.f32.gmra.mxu0 %v316
        %v318 = vpop.f32.mrf.mxu0
        %v319 = vadd.f32 0.0, %v318
        %v320 = vpop.f32.mrf.mxu0
        %321 = vdwg.mxu0
        %322 = vmatprep.subr.mxu0 0.0
        %323 = vmatpush1.msra.mxu0 0.0
        %324 = vmatprep.subr.mxu0 0.0
        %325 = vmatpush1.msra.mxu0 0.0
        %326 = vmatprep.subr.mxu0 0.0
        %327 = vmatpush1.msra.mxu0 0.0
        %328 = vmatprep.subr.mxu0 0.0
        %329 = vmatpush1.msra.mxu0 0.0
        %330 = vmatprep.subr.mxu0 0.0
        %331 = vmatpush1.msra.mxu0 0.0
        %332 = vmatprep.subr.mxu0 0.0
        %333 = vmatpush1.msra.mxu0 0.0
        %334 = vmatprep.subr.mxu0 0.0
        %335 = vmatpush1.msra.mxu0 0.0
        %336 = vmatprep.subr.mxu0 0.0
        %337 = vmatpush1.msra.mxu0 0.0
        %338 = vmatprep.subr.mxu0 0.0
        %339 = vmatpush1.msra.mxu0 0.0
        %340 = vmatprep.subr.mxu0 0.0
        %341 = vmatpush1.msra.mxu0 0.0
        %342 = vmatprep.subr.mxu0 0.0
        %343 = vmatpush1.msra.mxu0 0.0
        %344 = vmatprep.subr.mxu0 0.0
        %345 = vmatpush1.msra.mxu0 0.0
        %346 = vmatprep.subr.mxu0 0.0
        %347 = vmatpush1.msra.mxu0 0.0
        %348 = vmatprep.subr.mxu0 0.0
        %349 = vmatpush1.msra.mxu0 0.0
        %350 = vmatprep.subr.mxu0 0.0
        %v351 = vand.u32 %v228, 4294901760
        %v352 = vsub.f32 %v228, %v351
        %v353 = vand.u32 %v352, 4294901760
        %v354 = vsub.f32 %v352, %v353
        %v355 = vand.u32 %v354, 4294901760
        %356 = vmatpush1.msra.mxu0 %v355
        %357 = vmatprep.subr.mxu0 0.0
        %v358 = vand.u32 %v227, 4294901760
        %v359 = vsub.f32 %v227, %v358
        %v360 = vand.u32 %v359, 4294901760
        %v361 = vsub.f32 %v359, %v360
        %v362 = vand.u32 %v361, 4294901760
        %363 = vmatpush1.msra.mxu0 %v362
        %364 = vmatprep.subr.mxu0 0.0
        %365 = vmatpush2.msra.mxu0 0.0
        %366 = vmatprep.subr.mxu0 0.0
        %367 = vmatpush2.msra.mxu0 0.0
        %368 = vmatprep.subr.mxu0 0.0
        %369 = vmatpush2.msra.mxu0 0.0
        %370 = vmatprep.subr.mxu0 0.0
        %371 = vmatpush2.msra.mxu0 0.0
        %372 = vmatprep.subr.mxu0 0.0
        %373 = vmatpush2.msra.mxu0 0.0
        %374 = vmatprep.subr.mxu0 0.0
        %375 = vmatpush2.msra.mxu0 0.0
        %376 = vmatprep.subr.mxu0 0.0
        %377 = vmatpush2.msra.mxu0 0.0
        %378 = vmatprep.subr.mxu0 0.0
        %379 = vmatpush2.msra.mxu0 0.0
        %380 = vmatprep.subr.mxu0 0.0
        %381 = vmatpush2.msra.mxu0 0.0
        %382 = vmatprep.subr.mxu0 0.0
        %383 = vmatpush2.msra.mxu0 0.0
        %384 = vmatprep.subr.mxu0 0.0
        %385 = vmatpush2.msra.mxu0 0.0
        %386 = vmatprep.subr.mxu0 0.0
        %387 = vmatpush2.msra.mxu0 0.0
        %388 = vmatprep.subr.mxu0 0.0
        %389 = vmatpush2.msra.mxu0 0.0
        %390 = vmatprep.subr.mxu0 0.0
        %391 = vmatpush2.msra.mxu0 0.0
        %392 = vmatprep.subr.mxu0 0.0
        %393 = vmatpush2.msra.mxu0 0.0
        %394 = vmatprep.subr.mxu0 0.0
        %395 = vmatpush2.msra.mxu0 0.0
        %396 = vmatprep.mubr.f32.mxu0 0.0
        %v397 = vand.u32 %v230, 4294901760
        %398 = vmatmul.mubr.f32.gmra.mxu0 %v397
        %v399 = vpop.f32.mrf.mxu0
        %v400 = vadd.f32 %v309, %v399
        %v401 = vpop.f32.mrf.mxu0
        %402 = vmatprep.mubr.f32.mxu0 0.0
        %v403 = vand.u32 %v233, 4294901760
        %404 = vmatmul.mubr.f32.gmra.mxu0 %v403
        %v405 = vpop.f32.mrf.mxu0
        %v406 = vadd.f32 %v319, %v405
        %v407 = vpop.f32.mrf.mxu0
        %408 = vdwg.mxu0
        %409 = vmatprep.subr.mxu0 0.0
        %410 = vmatpush1.msra.mxu0 0.0
        %411 = vmatprep.subr.mxu0 0.0
        %412 = vmatpush1.msra.mxu0 0.0
        %413 = vmatprep.subr.mxu0 0.0
        %414 = vmatpush1.msra.mxu0 0.0
        %415 = vmatprep.subr.mxu0 0.0
        %416 = vmatpush1.msra.mxu0 0.0
        %417 = vmatprep.subr.mxu0 0.0
        %418 = vmatpush1.msra.mxu0 0.0
        %419 = vmatprep.subr.mxu0 0.0
        %420 = vmatpush1.msra.mxu0 0.0
        %421 = vmatprep.subr.mxu0 0.0
        %422 = vmatpush1.msra.mxu0 0.0
        %423 = vmatprep.subr.mxu0 0.0
        %424 = vmatpush1.msra.mxu0 0.0
        %425 = vmatprep.subr.mxu0 0.0
        %426 = vmatpush1.msra.mxu0 0.0
        %427 = vmatprep.subr.mxu0 0.0
        %428 = vmatpush1.msra.mxu0 0.0
        %429 = vmatprep.subr.mxu0 0.0
        %430 = vmatpush1.msra.mxu0 0.0
        %431 = vmatprep.subr.mxu0 0.0
        %432 = vmatpush1.msra.mxu0 0.0
        %433 = vmatprep.subr.mxu0 0.0
        %434 = vmatpush1.msra.mxu0 0.0
        %435 = vmatprep.subr.mxu0 0.0
        %436 = vmatpush1.msra.mxu0 0.0
        %437 = vmatprep.subr.mxu0 0.0
        %v438 = vand.u32 %v228, 4294901760
        %v439 = vsub.f32 %v228, %v438
        %440 = vmatpush1.msra.mxu0 %v439
        %441 = vmatprep.subr.mxu0 0.0
        %v442 = vand.u32 %v227, 4294901760
        %v443 = vsub.f32 %v227, %v442
        %444 = vmatpush1.msra.mxu0 %v443
        %445 = vmatprep.subr.mxu0 0.0
        %446 = vmatpush2.msra.mxu0 0.0
        %447 = vmatprep.subr.mxu0 0.0
        %448 = vmatpush2.msra.mxu0 0.0
        %449 = vmatprep.subr.mxu0 0.0
        %450 = vmatpush2.msra.mxu0 0.0
        %451 = vmatprep.subr.mxu0 0.0
        %452 = vmatpush2.msra.mxu0 0.0
        %453 = vmatprep.subr.mxu0 0.0
        %454 = vmatpush2.msra.mxu0 0.0
        %455 = vmatprep.subr.mxu0 0.0
        %456 = vmatpush2.msra.mxu0 0.0
        %457 = vmatprep.subr.mxu0 0.0
        %458 = vmatpush2.msra.mxu0 0.0
        %459 = vmatprep.subr.mxu0 0.0
        %460 = vmatpush2.msra.mxu0 0.0
        %461 = vmatprep.subr.mxu0 0.0
        %462 = vmatpush2.msra.mxu0 0.0
        %463 = vmatprep.subr.mxu0 0.0
        %464 = vmatpush2.msra.mxu0 0.0
        %465 = vmatprep.subr.mxu0 0.0
        %466 = vmatpush2.msra.mxu0 0.0
        %467 = vmatprep.subr.mxu0 0.0
        %468 = vmatpush2.msra.mxu0 0.0
        %469 = vmatprep.subr.mxu0 0.0
        %470 = vmatpush2.msra.mxu0 0.0
        %471 = vmatprep.subr.mxu0 0.0
        %472 = vmatpush2.msra.mxu0 0.0
        %473 = vmatprep.subr.mxu0 0.0
        %474 = vmatpush2.msra.mxu0 0.0
        %475 = vmatprep.subr.mxu0 0.0
        %476 = vmatpush2.msra.mxu0 0.0
        %477 = vmatprep.mubr.f32.mxu0 0.0
        %v478 = vand.u32 %v230, 4294901760
        %v479 = vsub.f32 %v230, %v478
        %480 = vmatmul.mubr.f32.gmra.mxu0 %v479
        %v481 = vpop.f32.mrf.mxu0
        %v482 = vadd.f32 %v400, %v481
        %v483 = vpop.f32.mrf.mxu0
        %484 = vmatprep.mubr.f32.mxu0 0.0
        %v485 = vand.u32 %v233, 4294901760
        %v486 = vsub.f32 %v233, %v485
        %487 = vmatmul.mubr.f32.gmra.mxu0 %v486
        %v488 = vpop.f32.mrf.mxu0
        %v489 = vadd.f32 %v406, %v488
        %v490 = vpop.f32.mrf.mxu0
        %491 = vdwg.mxu0
        %492 = vmatprep.subr.mxu0 0.0
        %493 = vmatpush1.msra.mxu0 0.0
        %494 = vmatprep.subr.mxu0 0.0
        %495 = vmatpush1.msra.mxu0 0.0
        %496 = vmatprep.subr.mxu0 0.0
        %497 = vmatpush1.msra.mxu0 0.0
        %498 = vmatprep.subr.mxu0 0.0
        %499 = vmatpush1.msra.mxu0 0.0
        %500 = vmatprep.subr.mxu0 0.0
        %501 = vmatpush1.msra.mxu0 0.0
        %502 = vmatprep.subr.mxu0 0.0
        %503 = vmatpush1.msra.mxu0 0.0
        %504 = vmatprep.subr.mxu0 0.0
        %505 = vmatpush1.msra.mxu0 0.0
        %506 = vmatprep.subr.mxu0 0.0
        %507 = vmatpush1.msra.mxu0 0.0
        %508 = vmatprep.subr.mxu0 0.0
        %509 = vmatpush1.msra.mxu0 0.0
        %510 = vmatprep.subr.mxu0 0.0
        %511 = vmatpush1.msra.mxu0 0.0
        %512 = vmatprep.subr.mxu0 0.0
        %513 = vmatpush1.msra.mxu0 0.0
        %514 = vmatprep.subr.mxu0 0.0
        %515 = vmatpush1.msra.mxu0 0.0
        %516 = vmatprep.subr.mxu0 0.0
        %517 = vmatpush1.msra.mxu0 0.0
        %518 = vmatprep.subr.mxu0 0.0
        %519 = vmatpush1.msra.mxu0 0.0
        %520 = vmatprep.subr.mxu0 0.0
        %v521 = vand.u32 %v228, 4294901760
        %522 = vmatpush1.msra.mxu0 %v521
        %523 = vmatprep.subr.mxu0 0.0
        %v524 = vand.u32 %v227, 4294901760
        %525 = vmatpush1.msra.mxu0 %v524
        %526 = vmatprep.subr.mxu0 0.0
        %527 = vmatpush2.msra.mxu0 0.0
        %528 = vmatprep.subr.mxu0 0.0
        %529 = vmatpush2.msra.mxu0 0.0
        %530 = vmatprep.subr.mxu0 0.0
        %531 = vmatpush2.msra.mxu0 0.0
        %532 = vmatprep.subr.mxu0 0.0
        %533 = vmatpush2.msra.mxu0 0.0
        %534 = vmatprep.subr.mxu0 0.0
        %535 = vmatpush2.msra.mxu0 0.0
        %536 = vmatprep.subr.mxu0 0.0
        %537 = vmatpush2.msra.mxu0 0.0
        %538 = vmatprep.subr.mxu0 0.0
        %539 = vmatpush2.msra.mxu0 0.0
        %540 = vmatprep.subr.mxu0 0.0
        %541 = vmatpush2.msra.mxu0 0.0
        %542 = vmatprep.subr.mxu0 0.0
        %543 = vmatpush2.msra.mxu0 0.0
        %544 = vmatprep.subr.mxu0 0.0
        %545 = vmatpush2.msra.mxu0 0.0
        %546 = vmatprep.subr.mxu0 0.0
        %547 = vmatpush2.msra.mxu0 0.0
        %548 = vmatprep.subr.mxu0 0.0
        %549 = vmatpush2.msra.mxu0 0.0
        %550 = vmatprep.subr.mxu0 0.0
        %551 = vmatpush2.msra.mxu0 0.0
        %552 = vmatprep.subr.mxu0 0.0
        %553 = vmatpush2.msra.mxu0 0.0
        %554 = vmatprep.subr.mxu0 0.0
        %555 = vmatpush2.msra.mxu0 0.0
        %556 = vmatprep.subr.mxu0 0.0
        %557 = vmatpush2.msra.mxu0 0.0
        %558 = vmatprep.mubr.f32.mxu0 0.0
        %v559 = vand.u32 %v230, 4294901760
        %v560 = vsub.f32 %v230, %v559
        %v561 = vand.u32 %v560, 4294901760
        %562 = vmatmul.mubr.f32.gmra.mxu0 %v561
        %v563 = vpop.f32.mrf.mxu0
        %v564 = vadd.f32 %v482, %v563
        %v565 = vpop.f32.mrf.mxu0
        %566 = vmatprep.mubr.f32.mxu0 0.0
        %v567 = vand.u32 %v233, 4294901760
        %v568 = vsub.f32 %v233, %v567
        %v569 = vand.u32 %v568, 4294901760
        %570 = vmatmul.mubr.f32.gmra.mxu0 %v569
        %v571 = vpop.f32.mrf.mxu0
        %v572 = vadd.f32 %v489, %v571
        %v573 = vpop.f32.mrf.mxu0
        %574 = vdwg.mxu0
        %575 = vmatprep.subr.mxu0 0.0
        %576 = vmatpush1.msra.mxu0 0.0
        %577 = vmatprep.subr.mxu0 0.0
        %578 = vmatpush1.msra.mxu0 0.0
        %579 = vmatprep.subr.mxu0 0.0
        %580 = vmatpush1.msra.mxu0 0.0
        %581 = vmatprep.subr.mxu0 0.0
        %582 = vmatpush1.msra.mxu0 0.0
        %583 = vmatprep.subr.mxu0 0.0
        %584 = vmatpush1.msra.mxu0 0.0
        %585 = vmatprep.subr.mxu0 0.0
        %586 = vmatpush1.msra.mxu0 0.0
        %587 = vmatprep.subr.mxu0 0.0
        %588 = vmatpush1.msra.mxu0 0.0
        %589 = vmatprep.subr.mxu0 0.0
        %590 = vmatpush1.msra.mxu0 0.0
        %591 = vmatprep.subr.mxu0 0.0
        %592 = vmatpush1.msra.mxu0 0.0
        %593 = vmatprep.subr.mxu0 0.0
        %594 = vmatpush1.msra.mxu0 0.0
        %595 = vmatprep.subr.mxu0 0.0
        %596 = vmatpush1.msra.mxu0 0.0
        %597 = vmatprep.subr.mxu0 0.0
        %598 = vmatpush1.msra.mxu0 0.0
        %599 = vmatprep.subr.mxu0 0.0
        %600 = vmatpush1.msra.mxu0 0.0
        %601 = vmatprep.subr.mxu0 0.0
        %602 = vmatpush1.msra.mxu0 0.0
        %603 = vmatprep.subr.mxu0 0.0
        %v604 = vand.u32 %v228, 4294901760
        %v605 = vsub.f32 %v228, %v604
        %v606 = vand.u32 %v605, 4294901760
        %607 = vmatpush1.msra.mxu0 %v606
        %608 = vmatprep.subr.mxu0 0.0
        %v609 = vand.u32 %v227, 4294901760
        %v610 = vsub.f32 %v227, %v609
        %v611 = vand.u32 %v610, 4294901760
        %612 = vmatpush1.msra.mxu0 %v611
        %613 = vmatprep.subr.mxu0 0.0
        %614 = vmatpush2.msra.mxu0 0.0
        %615 = vmatprep.subr.mxu0 0.0
        %616 = vmatpush2.msra.mxu0 0.0
        %617 = vmatprep.subr.mxu0 0.0
        %618 = vmatpush2.msra.mxu0 0.0
        %619 = vmatprep.subr.mxu0 0.0
        %620 = vmatpush2.msra.mxu0 0.0
        %621 = vmatprep.subr.mxu0 0.0
        %622 = vmatpush2.msra.mxu0 0.0
        %623 = vmatprep.subr.mxu0 0.0
        %624 = vmatpush2.msra.mxu0 0.0
        %625 = vmatprep.subr.mxu0 0.0
        %626 = vmatpush2.msra.mxu0 0.0
        %627 = vmatprep.subr.mxu0 0.0
        %628 = vmatpush2.msra.mxu0 0.0
        %629 = vmatprep.subr.mxu0 0.0
        %630 = vmatpush2.msra.mxu0 0.0
        %631 = vmatprep.subr.mxu0 0.0
        %632 = vmatpush2.msra.mxu0 0.0
        %633 = vmatprep.subr.mxu0 0.0
        %634 = vmatpush2.msra.mxu0 0.0
        %635 = vmatprep.subr.mxu0 0.0
        %636 = vmatpush2.msra.mxu0 0.0
        %637 = vmatprep.subr.mxu0 0.0
        %638 = vmatpush2.msra.mxu0 0.0
        %639 = vmatprep.subr.mxu0 0.0
        %640 = vmatpush2.msra.mxu0 0.0
        %641 = vmatprep.subr.mxu0 0.0
        %642 = vmatpush2.msra.mxu0 0.0
        %643 = vmatprep.subr.mxu0 0.0
        %644 = vmatpush2.msra.mxu0 0.0
        %645 = vmatprep.mubr.f32.mxu0 0.0
        %v646 = vand.u32 %v230, 4294901760
        %647 = vmatmul.mubr.f32.gmra.mxu0 %v646
        %v648 = vpop.f32.mrf.mxu0
        %v649 = vadd.f32 %v564, %v648
        %v650 = vpop.f32.mrf.mxu0
        %651 = vmatprep.mubr.f32.mxu0 0.0
        %v652 = vand.u32 %v233, 4294901760
        %653 = vmatmul.mubr.f32.gmra.mxu0 %v652
        %v654 = vpop.f32.mrf.mxu0
        %v655 = vadd.f32 %v572, %v654
        %v656 = vpop.f32.mrf.mxu0
        %657 = vdwg.mxu0
        %658 = vmatprep.subr.mxu0 0.0
        %659 = vmatpush1.msra.mxu0 0.0
        %660 = vmatprep.subr.mxu0 0.0
        %661 = vmatpush1.msra.mxu0 0.0
        %662 = vmatprep.subr.mxu0 0.0
        %663 = vmatpush1.msra.mxu0 0.0
        %664 = vmatprep.subr.mxu0 0.0
        %665 = vmatpush1.msra.mxu0 0.0
        %666 = vmatprep.subr.mxu0 0.0
        %667 = vmatpush1.msra.mxu0 0.0
        %668 = vmatprep.subr.mxu0 0.0
        %669 = vmatpush1.msra.mxu0 0.0
        %670 = vmatprep.subr.mxu0 0.0
        %671 = vmatpush1.msra.mxu0 0.0
        %672 = vmatprep.subr.mxu0 0.0
        %673 = vmatpush1.msra.mxu0 0.0
        %674 = vmatprep.subr.mxu0 0.0
        %675 = vmatpush1.msra.mxu0 0.0
        %676 = vmatprep.subr.mxu0 0.0
        %677 = vmatpush1.msra.mxu0 0.0
        %678 = vmatprep.subr.mxu0 0.0
        %679 = vmatpush1.msra.mxu0 0.0
        %680 = vmatprep.subr.mxu0 0.0
        %681 = vmatpush1.msra.mxu0 0.0
        %682 = vmatprep.subr.mxu0 0.0
        %683 = vmatpush1.msra.mxu0 0.0
        %684 = vmatprep.subr.mxu0 0.0
        %685 = vmatpush1.msra.mxu0 0.0
        %686 = vmatprep.subr.mxu0 0.0
        %v687 = vand.u32 %v228, 4294901760
        %688 = vmatpush1.msra.mxu0 %v687
        %689 = vmatprep.subr.mxu0 0.0
        %v690 = vand.u32 %v227, 4294901760
        %691 = vmatpush1.msra.mxu0 %v690
        %692 = vmatprep.subr.mxu0 0.0
        %693 = vmatpush2.msra.mxu0 0.0
        %694 = vmatprep.subr.mxu0 0.0
        %695 = vmatpush2.msra.mxu0 0.0
        %696 = vmatprep.subr.mxu0 0.0
        %697 = vmatpush2.msra.mxu0 0.0
        %698 = vmatprep.subr.mxu0 0.0
        %699 = vmatpush2.msra.mxu0 0.0
        %700 = vmatprep.subr.mxu0 0.0
        %701 = vmatpush2.msra.mxu0 0.0
        %702 = vmatprep.subr.mxu0 0.0
        %703 = vmatpush2.msra.mxu0 0.0
        %704 = vmatprep.subr.mxu0 0.0
        %705 = vmatpush2.msra.mxu0 0.0
        %706 = vmatprep.subr.mxu0 0.0
        %707 = vmatpush2.msra.mxu0 0.0
        %708 = vmatprep.subr.mxu0 0.0
        %709 = vmatpush2.msra.mxu0 0.0
        %710 = vmatprep.subr.mxu0 0.0
        %711 = vmatpush2.msra.mxu0 0.0
        %712 = vmatprep.subr.mxu0 0.0
        %713 = vmatpush2.msra.mxu0 0.0
        %714 = vmatprep.subr.mxu0 0.0
        %715 = vmatpush2.msra.mxu0 0.0
        %716 = vmatprep.subr.mxu0 0.0
        %717 = vmatpush2.msra.mxu0 0.0
        %718 = vmatprep.subr.mxu0 0.0
        %719 = vmatpush2.msra.mxu0 0.0
        %720 = vmatprep.subr.mxu0 0.0
        %721 = vmatpush2.msra.mxu0 0.0
        %722 = vmatprep.subr.mxu0 0.0
        %723 = vmatpush2.msra.mxu0 0.0
        %724 = vmatprep.mubr.f32.mxu0 0.0
        %v725 = vand.u32 %v230, 4294901760
        %726 = vmatmul.mubr.f32.gmra.mxu0 %v725
        %v727 = vpop.f32.mrf.mxu0
        %v728 = vadd.f32 %v649, %v727
        %v729 = vpop.f32.mrf.mxu0
        %730 = vmatprep.mubr.f32.mxu0 0.0
        %v731 = vand.u32 %v233, 4294901760
        %732 = vmatmul.mubr.f32.gmra.mxu0 %v731
        %v733 = vpop.f32.mrf.mxu0
        %v734 = vadd.f32 %v655, %v733
        %v735 = vpop.f32.mrf.mxu0
        %736 = vdwg.mxu0
        %s737 = scalar_lea.vmem %s176, 16 [#allocation8]
        %738 = vst.msk [vmem:[%s737] sm:$0xff] %vm179, %v728
        %739 = vst.msk [vmem:[%s737 + $0x8] sm:$0xff] %vm179, %v734
        %v740 = vld [vmem:[#allocation2 + $0x4] sm:$0xff]
        %v741 = vld [vmem:[#allocation2 + $0xc] sm:$0xff]
        %v742 = vmul.f32 %v740, 0.20416369
        %v743 = vmul.f32 %v741, 0.20416369
        %v744 = vld [vmem:[#allocation2 + $0x3] sm:$0xff]
        %v745 = vld [vmem:[#allocation2 + $0xb] sm:$0xff]
        %v746 = vld [vmem:[#allocation2 + $0x5] sm:$0xff]
        %v747 = vld [vmem:[#allocation2 + $0xd] sm:$0xff]
        %v748 = vadd.f32 %v744, %v746
        %v749 = vadd.f32 %v745, %v747
        %v750 = vmul.f32 %v748, 0.18017381
        %v751 = vmul.f32 %v749, 0.18017381
        %v752 = vadd.f32 %v742, %v750
        %v753 = vadd.f32 %v743, %v751
        %v754 = vld [vmem:[#allocation2 + $0x2] sm:$0xff]
        %v755 = vld [vmem:[#allocation2 + $0xa] sm:$0xff]
        %v756 = vld [vmem:[#allocation2 + $0x6] sm:$0xff]
        %v757 = vld [vmem:[#allocation2 + $0xe] sm:$0xff]
        %v758 = vadd.f32 %v754, %v756
        %v759 = vadd.f32 %v755, %v757
        %v760 = vmul.f32 %v758, 0.12383153
        %v761 = vmul.f32 %v759, 0.12383153
        %v762 = vadd.f32 %v752, %v760
        %v763 = vadd.f32 %v753, %v761
        %v764 = vld [vmem:[#allocation2 + $0x1] sm:$0xff]
        %v765 = vld [vmem:[#allocation2 + $0x9] sm:$0xff]
        %v766 = vld [vmem:[#allocation2 + $0x7] sm:$0xff]
        %v767 = vld [vmem:[#allocation2 + $0xf] sm:$0xff]
        %v768 = vadd.f32 %v764, %v766
        %v769 = vadd.f32 %v765, %v767
        %v770 = vmul.f32 %v768, 0.066282235
        %v771 = vmul.f32 %v769, 0.066282235
        %v772 = vadd.f32 %v762, %v770
        %v773 = vadd.f32 %v763, %v771
        %v774 = vld [vmem:[#allocation2] sm:$0xff]
        %v775 = vld [vmem:[#allocation2 + $0x8] sm:$0xff]
        %v776 = vld [vmem:[#allocation2 + $0x10] sm:$0xff]
        %v777 = vadd.f32 %v774, %v775
        %v778 = vadd.f32 %v775, %v776
        %v779 = vmul.f32 %v777, 0.027630549
        %v780 = vmul.f32 %v778, 0.027630549
        %v781 = vadd.f32 %v772, %v779
        %v782 = vadd.f32 %v773, %v780
        %s783 = scalar_lea.vmem [#allocation6], 16
        %v784 = vld [vmem:[%s783] sm:$0xff]
        %v785 = vld [vmem:[%s783 + $0x8] sm:$0xff]
        %v787 = vsel %vm179, %v781, 0
        %v790 = vsel %vm179, %v782, 0
        %792 = vmatprep.subr.mxu0 0.0
        %793 = vmatpush1.msra.mxu0 0.0
        %794 = vmatprep.subr.mxu0 0.0
        %795 = vmatpush1.msra.mxu0 0.0
        %796 = vmatprep.subr.mxu0 0.0
        %797 = vmatpush1.msra.mxu0 0.0
        %798 = vmatprep.subr.mxu0 0.0
        %799 = vmatpush1.msra.mxu0 0.0
        %800 = vmatprep.subr.mxu0 0.0
        %801 = vmatpush1.msra.mxu0 0.0
        %802 = vmatprep.subr.mxu0 0.0
        %803 = vmatpush1.msra.mxu0 0.0
        %804 = vmatprep.subr.mxu0 0.0
        %805 = vmatpush1.msra.mxu0 0.0
        %806 = vmatprep.subr.mxu0 0.0
        %807 = vmatpush1.msra.mxu0 0.0
        %808 = vmatprep.subr.mxu0 0.0
        %809 = vmatpush1.msra.mxu0 0.0
        %810 = vmatprep.subr.mxu0 0.0
        %811 = vmatpush1.msra.mxu0 0.0
        %812 = vmatprep.subr.mxu0 0.0
        %813 = vmatpush1.msra.mxu0 0.0
        %814 = vmatprep.subr.mxu0 0.0
        %815 = vmatpush1.msra.mxu0 0.0
        %816 = vmatprep.subr.mxu0 0.0
        %817 = vmatpush1.msra.mxu0 0.0
        %818 = vmatprep.subr.mxu0 0.0
        %819 = vmatpush1.msra.mxu0 0.0
        %820 = vmatprep.subr.mxu0 0.0
        %v821 = vand.u32 %v785, 4294901760
        %822 = vmatpush1.msra.mxu0 %v821
        %823 = vmatprep.subr.mxu0 0.0
        %v824 = vand.u32 %v784, 4294901760
        %825 = vmatpush1.msra.mxu0 %v824
        %826 = vmatprep.subr.mxu0 0.0
        %827 = vmatpush2.msra.mxu0 0.0
        %828 = vmatprep.subr.mxu0 0.0
        %829 = vmatpush2.msra.mxu0 0.0
        %830 = vmatprep.subr.mxu0 0.0
        %831 = vmatpush2.msra.mxu0 0.0
        %832 = vmatprep.subr.mxu0 0.0
        %833 = vmatpush2.msra.mxu0 0.0
        %834 = vmatprep.subr.mxu0 0.0
        %835 = vmatpush2.msra.mxu0 0.0
        %836 = vmatprep.subr.mxu0 0.0
        %837 = vmatpush2.msra.mxu0 0.0
        %838 = vmatprep.subr.mxu0 0.0
        %839 = vmatpush2.msra.mxu0 0.0
        %840 = vmatprep.subr.mxu0 0.0
        %841 = vmatpush2.msra.mxu0 0.0
        %842 = vmatprep.subr.mxu0 0.0
        %843 = vmatpush2.msra.mxu0 0.0
        %844 = vmatprep.subr.mxu0 0.0
        %845 = vmatpush2.msra.mxu0 0.0
        %846 = vmatprep.subr.mxu0 0.0
        %847 = vmatpush2.msra.mxu0 0.0
        %848 = vmatprep.subr.mxu0 0.0
        %849 = vmatpush2.msra.mxu0 0.0
        %850 = vmatprep.subr.mxu0 0.0
        %851 = vmatpush2.msra.mxu0 0.0
        %852 = vmatprep.subr.mxu0 0.0
        %853 = vmatpush2.msra.mxu0 0.0
        %854 = vmatprep.subr.mxu0 0.0
        %855 = vmatpush2.msra.mxu0 0.0
        %856 = vmatprep.subr.mxu0 0.0
        %857 = vmatpush2.msra.mxu0 0.0
        %858 = vmatprep.mubr.f32.mxu0 0.0
        %v859 = vand.u32 %v787, 4294901760
        %v860 = vsub.f32 %v787, %v859
        %v861 = vand.u32 %v860, 4294901760
        %v862 = vsub.f32 %v860, %v861
        %v863 = vand.u32 %v862, 4294901760
        %864 = vmatmul.mubr.f32.gmra.mxu0 %v863
        %v865 = vpop.f32.mrf.mxu0
        %v866 = vadd.f32 0.0, %v865
        %v867 = vpop.f32.mrf.mxu0
        %868 = vmatprep.mubr.f32.mxu0 0.0
        %v869 = vand.u32 %v790, 4294901760
        %v870 = vsub.f32 %v790, %v869
        %v871 = vand.u32 %v870, 4294901760
        %v872 = vsub.f32 %v870, %v871
        %v873 = vand.u32 %v872, 4294901760
        %874 = vmatmul.mubr.f32.gmra.mxu0 %v873
        %v875 = vpop.f32.mrf.mxu0
        %v876 = vadd.f32 0.0, %v875
        %v877 = vpop.f32.mrf.mxu0
        %878 = vdwg.mxu0
        %879 = vmatprep.subr.mxu0 0.0
        %880 = vmatpush1.msra.mxu0 0.0
        %881 = vmatprep.subr.mxu0 0.0
        %882 = vmatpush1.msra.mxu0 0.0
        %883 = vmatprep.subr.mxu0 0.0
        %884 = vmatpush1.msra.mxu0 0.0
        %885 = vmatprep.subr.mxu0 0.0
        %886 = vmatpush1.msra.mxu0 0.0
        %887 = vmatprep.subr.mxu0 0.0
        %888 = vmatpush1.msra.mxu0 0.0
        %889 = vmatprep.subr.mxu0 0.0
        %890 = vmatpush1.msra.mxu0 0.0
        %891 = vmatprep.subr.mxu0 0.0
        %892 = vmatpush1.msra.mxu0 0.0
        %893 = vmatprep.subr.mxu0 0.0
        %894 = vmatpush1.msra.mxu0 0.0
        %895 = vmatprep.subr.mxu0 0.0
        %896 = vmatpush1.msra.mxu0 0.0
        %897 = vmatprep.subr.mxu0 0.0
        %898 = vmatpush1.msra.mxu0 0.0
        %899 = vmatprep.subr.mxu0 0.0
        %900 = vmatpush1.msra.mxu0 0.0
        %901 = vmatprep.subr.mxu0 0.0
        %902 = vmatpush1.msra.mxu0 0.0
        %903 = vmatprep.subr.mxu0 0.0
        %904 = vmatpush1.msra.mxu0 0.0
        %905 = vmatprep.subr.mxu0 0.0
        %906 = vmatpush1.msra.mxu0 0.0
        %907 = vmatprep.subr.mxu0 0.0
        %v908 = vand.u32 %v785, 4294901760
        %v909 = vsub.f32 %v785, %v908
        %v910 = vand.u32 %v909, 4294901760
        %v911 = vsub.f32 %v909, %v910
        %v912 = vand.u32 %v911, 4294901760
        %913 = vmatpush1.msra.mxu0 %v912
        %914 = vmatprep.subr.mxu0 0.0
        %v915 = vand.u32 %v784, 4294901760
        %v916 = vsub.f32 %v784, %v915
        %v917 = vand.u32 %v916, 4294901760
        %v918 = vsub.f32 %v916, %v917
        %v919 = vand.u32 %v918, 4294901760
        %920 = vmatpush1.msra.mxu0 %v919
        %921 = vmatprep.subr.mxu0 0.0
        %922 = vmatpush2.msra.mxu0 0.0
        %923 = vmatprep.subr.mxu0 0.0
        %924 = vmatpush2.msra.mxu0 0.0
        %925 = vmatprep.subr.mxu0 0.0
        %926 = vmatpush2.msra.mxu0 0.0
        %927 = vmatprep.subr.mxu0 0.0
        %928 = vmatpush2.msra.mxu0 0.0
        %929 = vmatprep.subr.mxu0 0.0
        %930 = vmatpush2.msra.mxu0 0.0
        %931 = vmatprep.subr.mxu0 0.0
        %932 = vmatpush2.msra.mxu0 0.0
        %933 = vmatprep.subr.mxu0 0.0
        %934 = vmatpush2.msra.mxu0 0.0
        %935 = vmatprep.subr.mxu0 0.0
        %936 = vmatpush2.msra.mxu0 0.0
        %937 = vmatprep.subr.mxu0 0.0
        %938 = vmatpush2.msra.mxu0 0.0
        %939 = vmatprep.subr.mxu0 0.0
        %940 = vmatpush2.msra.mxu0 0.0
        %941 = vmatprep.subr.mxu0 0.0
        %942 = vmatpush2.msra.mxu0 0.0
        %943 = vmatprep.subr.mxu0 0.0
        %944 = vmatpush2.msra.mxu0 0.0
        %945 = vmatprep.subr.mxu0 0.0
        %946 = vmatpush2.msra.mxu0 0.0
        %947 = vmatprep.subr.mxu0 0.0
        %948 = vmatpush2.msra.mxu0 0.0
        %949 = vmatprep.subr.mxu0 0.0
        %950 = vmatpush2.msra.mxu0 0.0
        %951 = vmatprep.subr.mxu0 0.0
        %952 = vmatpush2.msra.mxu0 0.0
        %953 = vmatprep.mubr.f32.mxu0 0.0
        %v954 = vand.u32 %v787, 4294901760
        %955 = vmatmul.mubr.f32.gmra.mxu0 %v954
        %v956 = vpop.f32.mrf.mxu0
        %v957 = vadd.f32 %v866, %v956
        %v958 = vpop.f32.mrf.mxu0
        %959 = vmatprep.mubr.f32.mxu0 0.0
        %v960 = vand.u32 %v790, 4294901760
        %961 = vmatmul.mubr.f32.gmra.mxu0 %v960
        %v962 = vpop.f32.mrf.mxu0
        %v963 = vadd.f32 %v876, %v962
        %v964 = vpop.f32.mrf.mxu0
        %965 = vdwg.mxu0
        %966 = vmatprep.subr.mxu0 0.0
        %967 = vmatpush1.msra.mxu0 0.0
        %968 = vmatprep.subr.mxu0 0.0
        %969 = vmatpush1.msra.mxu0 0.0
        %970 = vmatprep.subr.mxu0 0.0
        %971 = vmatpush1.msra.mxu0 0.0
        %972 = vmatprep.subr.mxu0 0.0
        %973 = vmatpush1.msra.mxu0 0.0
        %974 = vmatprep.subr.mxu0 0.0
        %975 = vmatpush1.msra.mxu0 0.0
        %976 = vmatprep.subr.mxu0 0.0
        %977 = vmatpush1.msra.mxu0 0.0
        %978 = vmatprep.subr.mxu0 0.0
        %979 = vmatpush1.msra.mxu0 0.0
        %980 = vmatprep.subr.mxu0 0.0
        %981 = vmatpush1.msra.mxu0 0.0
        %982 = vmatprep.subr.mxu0 0.0
        %983 = vmatpush1.msra.mxu0 0.0
        %984 = vmatprep.subr.mxu0 0.0
        %985 = vmatpush1.msra.mxu0 0.0
        %986 = vmatprep.subr.mxu0 0.0
        %987 = vmatpush1.msra.mxu0 0.0
        %988 = vmatprep.subr.mxu0 0.0
        %989 = vmatpush1.msra.mxu0 0.0
        %990 = vmatprep.subr.mxu0 0.0
        %991 = vmatpush1.msra.mxu0 0.0
        %992 = vmatprep.subr.mxu0 0.0
        %993 = vmatpush1.msra.mxu0 0.0
        %994 = vmatprep.subr.mxu0 0.0
        %v995 = vand.u32 %v785, 4294901760
        %v996 = vsub.f32 %v785, %v995
        %997 = vmatpush1.msra.mxu0 %v996
        %998 = vmatprep.subr.mxu0 0.0
        %v999 = vand.u32 %v784, 4294901760
        %v1000 = vsub.f32 %v784, %v999
        %1001 = vmatpush1.msra.mxu0 %v1000
        %1002 = vmatprep.subr.mxu0 0.0
        %1003 = vmatpush2.msra.mxu0 0.0
        %1004 = vmatprep.subr.mxu0 0.0
        %1005 = vmatpush2.msra.mxu0 0.0
        %1006 = vmatprep.subr.mxu0 0.0
        %1007 = vmatpush2.msra.mxu0 0.0
        %1008 = vmatprep.subr.mxu0 0.0
        %1009 = vmatpush2.msra.mxu0 0.0
        %1010 = vmatprep.subr.mxu0 0.0
        %1011 = vmatpush2.msra.mxu0 0.0
        %1012 = vmatprep.subr.mxu0 0.0
        %1013 = vmatpush2.msra.mxu0 0.0
        %1014 = vmatprep.subr.mxu0 0.0
        %1015 = vmatpush2.msra.mxu0 0.0
        %1016 = vmatprep.subr.mxu0 0.0
        %1017 = vmatpush2.msra.mxu0 0.0
        %1018 = vmatprep.subr.mxu0 0.0
        %1019 = vmatpush2.msra.mxu0 0.0
        %1020 = vmatprep.subr.mxu0 0.0
        %1021 = vmatpush2.msra.mxu0 0.0
        %1022 = vmatprep.subr.mxu0 0.0
        %1023 = vmatpush2.msra.mxu0 0.0
        %1024 = vmatprep.subr.mxu0 0.0
        %1025 = vmatpush2.msra.mxu0 0.0
        %1026 = vmatprep.subr.mxu0 0.0
        %1027 = vmatpush2.msra.mxu0 0.0
        %1028 = vmatprep.subr.mxu0 0.0
        %1029 = vmatpush2.msra.mxu0 0.0
        %1030 = vmatprep.subr.mxu0 0.0
        %1031 = vmatpush2.msra.mxu0 0.0
        %1032 = vmatprep.subr.mxu0 0.0
        %1033 = vmatpush2.msra.mxu0 0.0
        %1034 = vmatprep.mubr.f32.mxu0 0.0
        %v1035 = vand.u32 %v787, 4294901760
        %v1036 = vsub.f32 %v787, %v1035
        %1037 = vmatmul.mubr.f32.gmra.mxu0 %v1036
        %v1038 = vpop.f32.mrf.mxu0
        %v1039 = vadd.f32 %v957, %v1038
        %v1040 = vpop.f32.mrf.mxu0
        %1041 = vmatprep.mubr.f32.mxu0 0.0
        %v1042 = vand.u32 %v790, 4294901760
        %v1043 = vsub.f32 %v790, %v1042
        %1044 = vmatmul.mubr.f32.gmra.mxu0 %v1043
        %v1045 = vpop.f32.mrf.mxu0
        %v1046 = vadd.f32 %v963, %v1045
        %v1047 = vpop.f32.mrf.mxu0
        %1048 = vdwg.mxu0
        %1049 = vmatprep.subr.mxu0 0.0
        %1050 = vmatpush1.msra.mxu0 0.0
        %1051 = vmatprep.subr.mxu0 0.0
        %1052 = vmatpush1.msra.mxu0 0.0
        %1053 = vmatprep.subr.mxu0 0.0
        %1054 = vmatpush1.msra.mxu0 0.0
        %1055 = vmatprep.subr.mxu0 0.0
        %1056 = vmatpush1.msra.mxu0 0.0
        %1057 = vmatprep.subr.mxu0 0.0
        %1058 = vmatpush1.msra.mxu0 0.0
        %1059 = vmatprep.subr.mxu0 0.0
        %1060 = vmatpush1.msra.mxu0 0.0
        %1061 = vmatprep.subr.mxu0 0.0
        %1062 = vmatpush1.msra.mxu0 0.0
        %1063 = vmatprep.subr.mxu0 0.0
        %1064 = vmatpush1.msra.mxu0 0.0
        %1065 = vmatprep.subr.mxu0 0.0
        %1066 = vmatpush1.msra.mxu0 0.0
        %1067 = vmatprep.subr.mxu0 0.0
        %1068 = vmatpush1.msra.mxu0 0.0
        %1069 = vmatprep.subr.mxu0 0.0
        %1070 = vmatpush1.msra.mxu0 0.0
        %1071 = vmatprep.subr.mxu0 0.0
        %1072 = vmatpush1.msra.mxu0 0.0
        %1073 = vmatprep.subr.mxu0 0.0
        %1074 = vmatpush1.msra.mxu0 0.0
        %1075 = vmatprep.subr.mxu0 0.0
        %1076 = vmatpush1.msra.mxu0 0.0
        %1077 = vmatprep.subr.mxu0 0.0
        %v1078 = vand.u32 %v785, 4294901760
        %1079 = vmatpush1.msra.mxu0 %v1078
        %1080 = vmatprep.subr.mxu0 0.0
        %v1081 = vand.u32 %v784, 4294901760
        %1082 = vmatpush1.msra.mxu0 %v1081
        %1083 = vmatprep.subr.mxu0 0.0
        %1084 = vmatpush2.msra.mxu0 0.0
        %1085 = vmatprep.subr.mxu0 0.0
        %1086 = vmatpush2.msra.mxu0 0.0
        %1087 = vmatprep.subr.mxu0 0.0
        %1088 = vmatpush2.msra.mxu0 0.0
        %1089 = vmatprep.subr.mxu0 0.0
        %1090 = vmatpush2.msra.mxu0 0.0
        %1091 = vmatprep.subr.mxu0 0.0
        %1092 = vmatpush2.msra.mxu0 0.0
        %1093 = vmatprep.subr.mxu0 0.0
        %1094 = vmatpush2.msra.mxu0 0.0
        %1095 = vmatprep.subr.mxu0 0.0
        %1096 = vmatpush2.msra.mxu0 0.0
        %1097 = vmatprep.subr.mxu0 0.0
        %1098 = vmatpush2.msra.mxu0 0.0
        %1099 = vmatprep.subr.mxu0 0.0
        %1100 = vmatpush2.msra.mxu0 0.0
        %1101 = vmatprep.subr.mxu0 0.0
        %1102 = vmatpush2.msra.mxu0 0.0
        %1103 = vmatprep.subr.mxu0 0.0
        %1104 = vmatpush2.msra.mxu0 0.0
        %1105 = vmatprep.subr.mxu0 0.0
        %1106 = vmatpush2.msra.mxu0 0.0
        %1107 = vmatprep.subr.mxu0 0.0
        %1108 = vmatpush2.msra.mxu0 0.0
        %1109 = vmatprep.subr.mxu0 0.0
        %1110 = vmatpush2.msra.mxu0 0.0
        %1111 = vmatprep.subr.mxu0 0.0
        %1112 = vmatpush2.msra.mxu0 0.0
        %1113 = vmatprep.subr.mxu0 0.0
        %1114 = vmatpush2.msra.mxu0 0.0
        %1115 = vmatprep.mubr.f32.mxu0 0.0
        %v1116 = vand.u32 %v787, 4294901760
        %v1117 = vsub.f32 %v787, %v1116
        %v1118 = vand.u32 %v1117, 4294901760
        %1119 = vmatmul.mubr.f32.gmra.mxu0 %v1118
        %v1120 = vpop.f32.mrf.mxu0
        %v1121 = vadd.f32 %v1039, %v1120
        %v1122 = vpop.f32.mrf.mxu0
        %1123 = vmatprep.mubr.f32.mxu0 0.0
        %v1124 = vand.u32 %v790, 4294901760
        %v1125 = vsub.f32 %v790, %v1124
        %v1126 = vand.u32 %v1125, 4294901760
        %1127 = vmatmul.mubr.f32.gmra.mxu0 %v1126
        %v1128 = vpop.f32.mrf.mxu0
        %v1129 = vadd.f32 %v1046, %v1128
        %v1130 = vpop.f32.mrf.mxu0
        %1131 = vdwg.mxu0
        %1132 = vmatprep.subr.mxu0 0.0
        %1133 = vmatpush1.msra.mxu0 0.0
        %1134 = vmatprep.subr.mxu0 0.0
        %1135 = vmatpush1.msra.mxu0 0.0
        %1136 = vmatprep.subr.mxu0 0.0
        %1137 = vmatpush1.msra.mxu0 0.0
        %1138 = vmatprep.subr.mxu0 0.0
        %1139 = vmatpush1.msra.mxu0 0.0
        %1140 = vmatprep.subr.mxu0 0.0
        %1141 = vmatpush1.msra.mxu0 0.0
        %1142 = vmatprep.subr.mxu0 0.0
        %1143 = vmatpush1.msra.mxu0 0.0
        %1144 = vmatprep.subr.mxu0 0.0
        %1145 = vmatpush1.msra.mxu0 0.0
        %1146 = vmatprep.subr.mxu0 0.0
        %1147 = vmatpush1.msra.mxu0 0.0
        %1148 = vmatprep.subr.mxu0 0.0
        %1149 = vmatpush1.msra.mxu0 0.0
        %1150 = vmatprep.subr.mxu0 0.0
        %1151 = vmatpush1.msra.mxu0 0.0
        %1152 = vmatprep.subr.mxu0 0.0
        %1153 = vmatpush1.msra.mxu0 0.0
        %1154 = vmatprep.subr.mxu0 0.0
        %1155 = vmatpush1.msra.mxu0 0.0
        %1156 = vmatprep.subr.mxu0 0.0
        %1157 = vmatpush1.msra.mxu0 0.0
        %1158 = vmatprep.subr.mxu0 0.0
        %1159 = vmatpush1.msra.mxu0 0.0
        %1160 = vmatprep.subr.mxu0 0.0
        %v1161 = vand.u32 %v785, 4294901760
        %v1162 = vsub.f32 %v785, %v1161
        %v1163 = vand.u32 %v1162, 4294901760
        %1164 = vmatpush1.msra.mxu0 %v1163
        %1165 = vmatprep.subr.mxu0 0.0
        %v1166 = vand.u32 %v784, 4294901760
        %v1167 = vsub.f32 %v784, %v1166
        %v1168 = vand.u32 %v1167, 4294901760
        %1169 = vmatpush1.msra.mxu0 %v1168
        %1170 = vmatprep.subr.mxu0 0.0
        %1171 = vmatpush2.msra.mxu0 0.0
        %1172 = vmatprep.subr.mxu0 0.0
        %1173 = vmatpush2.msra.mxu0 0.0
        %1174 = vmatprep.subr.mxu0 0.0
        %1175 = vmatpush2.msra.mxu0 0.0
        %1176 = vmatprep.subr.mxu0 0.0
        %1177 = vmatpush2.msra.mxu0 0.0
        %1178 = vmatprep.subr.mxu0 0.0
        %1179 = vmatpush2.msra.mxu0 0.0
        %1180 = vmatprep.subr.mxu0 0.0
        %1181 = vmatpush2.msra.mxu0 0.0
        %1182 = vmatprep.subr.mxu0 0.0
        %1183 = vmatpush2.msra.mxu0 0.0
        %1184 = vmatprep.subr.mxu0 0.0
        %1185 = vmatpush2.msra.mxu0 0.0
        %1186 = vmatprep.subr.mxu0 0.0
        %1187 = vmatpush2.msra.mxu0 0.0
        %1188 = vmatprep.subr.mxu0 0.0
        %1189 = vmatpush2.msra.mxu0 0.0
        %1190 = vmatprep.subr.mxu0 0.0
        %1191 = vmatpush2.msra.mxu0 0.0
        %1192 = vmatprep.subr.mxu0 0.0
        %1193 = vmatpush2.msra.mxu0 0.0
        %1194 = vmatprep.subr.mxu0 0.0
        %1195 = vmatpush2.msra.mxu0 0.0
        %1196 = vmatprep.subr.mxu0 0.0
        %1197 = vmatpush2.msra.mxu0 0.0
        %1198 = vmatprep.subr.mxu0 0.0
        %1199 = vmatpush2.msra.mxu0 0.0
        %1200 = vmatprep.subr.mxu0 0.0
        %1201 = vmatpush2.msra.mxu0 0.0
        %1202 = vmatprep.mubr.f32.mxu0 0.0
        %v1203 = vand.u32 %v787, 4294901760
        %1204 = vmatmul.mubr.f32.gmra.mxu0 %v1203
        %v1205 = vpop.f32.mrf.mxu0
        %v1206 = vadd.f32 %v1121, %v1205
        %v1207 = vpop.f32.mrf.mxu0
        %1208 = vmatprep.mubr.f32.mxu0 0.0
        %v1209 = vand.u32 %v790, 4294901760
        %1210 = vmatmul.mubr.f32.gmra.mxu0 %v1209
        %v1211 = vpop.f32.mrf.mxu0
        %v1212 = vadd.f32 %v1129, %v1211
        %v1213 = vpop.f32.mrf.mxu0
        %1214 = vdwg.mxu0
        %1215 = vmatprep.subr.mxu0 0.0
        %1216 = vmatpush1.msra.mxu0 0.0
        %1217 = vmatprep.subr.mxu0 0.0
        %1218 = vmatpush1.msra.mxu0 0.0
        %1219 = vmatprep.subr.mxu0 0.0
        %1220 = vmatpush1.msra.mxu0 0.0
        %1221 = vmatprep.subr.mxu0 0.0
        %1222 = vmatpush1.msra.mxu0 0.0
        %1223 = vmatprep.subr.mxu0 0.0
        %1224 = vmatpush1.msra.mxu0 0.0
        %1225 = vmatprep.subr.mxu0 0.0
        %1226 = vmatpush1.msra.mxu0 0.0
        %1227 = vmatprep.subr.mxu0 0.0
        %1228 = vmatpush1.msra.mxu0 0.0
        %1229 = vmatprep.subr.mxu0 0.0
        %1230 = vmatpush1.msra.mxu0 0.0
        %1231 = vmatprep.subr.mxu0 0.0
        %1232 = vmatpush1.msra.mxu0 0.0
        %1233 = vmatprep.subr.mxu0 0.0
        %1234 = vmatpush1.msra.mxu0 0.0
        %1235 = vmatprep.subr.mxu0 0.0
        %1236 = vmatpush1.msra.mxu0 0.0
        %1237 = vmatprep.subr.mxu0 0.0
        %1238 = vmatpush1.msra.mxu0 0.0
        %1239 = vmatprep.subr.mxu0 0.0
        %1240 = vmatpush1.msra.mxu0 0.0
        %1241 = vmatprep.subr.mxu0 0.0
        %1242 = vmatpush1.msra.mxu0 0.0
        %1243 = vmatprep.subr.mxu0 0.0
        %v1244 = vand.u32 %v785, 4294901760
        %1245 = vmatpush1.msra.mxu0 %v1244
        %1246 = vmatprep.subr.mxu0 0.0
        %v1247 = vand.u32 %v784, 4294901760
        %1248 = vmatpush1.msra.mxu0 %v1247
        %1249 = vmatprep.subr.mxu0 0.0
        %1250 = vmatpush2.msra.mxu0 0.0
        %1251 = vmatprep.subr.mxu0 0.0
        %1252 = vmatpush2.msra.mxu0 0.0
        %1253 = vmatprep.subr.mxu0 0.0
        %1254 = vmatpush2.msra.mxu0 0.0
        %1255 = vmatprep.subr.mxu0 0.0
        %1256 = vmatpush2.msra.mxu0 0.0
        %1257 = vmatprep.subr.mxu0 0.0
        %1258 = vmatpush2.msra.mxu0 0.0
        %1259 = vmatprep.subr.mxu0 0.0
        %1260 = vmatpush2.msra.mxu0 0.0
        %1261 = vmatprep.subr.mxu0 0.0
        %1262 = vmatpush2.msra.mxu0 0.0
        %1263 = vmatprep.subr.mxu0 0.0
        %1264 = vmatpush2.msra.mxu0 0.0
        %1265 = vmatprep.subr.mxu0 0.0
        %1266 = vmatpush2.msra.mxu0 0.0
        %1267 = vmatprep.subr.mxu0 0.0
        %1268 = vmatpush2.msra.mxu0 0.0
        %1269 = vmatprep.subr.mxu0 0.0
        %1270 = vmatpush2.msra.mxu0 0.0
        %1271 = vmatprep.subr.mxu0 0.0
        %1272 = vmatpush2.msra.mxu0 0.0
        %1273 = vmatprep.subr.mxu0 0.0
        %1274 = vmatpush2.msra.mxu0 0.0
        %1275 = vmatprep.subr.mxu0 0.0
        %1276 = vmatpush2.msra.mxu0 0.0
        %1277 = vmatprep.subr.mxu0 0.0
        %1278 = vmatpush2.msra.mxu0 0.0
        %1279 = vmatprep.subr.mxu0 0.0
        %1280 = vmatpush2.msra.mxu0 0.0
        %1281 = vmatprep.mubr.f32.mxu0 0.0
        %v1282 = vand.u32 %v787, 4294901760
        %1283 = vmatmul.mubr.f32.gmra.mxu0 %v1282
        %v1284 = vpop.f32.mrf.mxu0
        %v1285 = vadd.f32 %v1206, %v1284
        %v1286 = vpop.f32.mrf.mxu0
        %1287 = vmatprep.mubr.f32.mxu0 0.0
        %v1288 = vand.u32 %v790, 4294901760
        %1289 = vmatmul.mubr.f32.gmra.mxu0 %v1288
        %v1290 = vpop.f32.mrf.mxu0
        %v1291 = vadd.f32 %v1212, %v1290
        %v1292 = vpop.f32.mrf.mxu0
        %1293 = vdwg.mxu0
        %s1294 = scalar_lea.vmem %s176, 32 [#allocation8]
        %1295 = vst.msk [vmem:[%s1294] sm:$0xff] %vm179, %v1285
        %1296 = vst.msk [vmem:[%s1294 + $0x8] sm:$0xff] %vm179, %v1291
        %s1297 = sand.u32 %s75, 1
        %s1298 = scalar_lea.sflag [#allocation5], %s1297
        %s1299 = sand.u32 %s75, 1
        %s1300 = smul.addr %s1299, 48
        %s1301 = scalar_lea.vmem [#allocation8], %s1300
        // Predicated region
        $region37: #{tpu_custom_call.1} parent=27 // pred_check
          %p1302 = pneg %p85
        $region38: #{tpu_custom_call.1} parent=27 // pred_check_branch
          %1304 = sbr.rel (%p1302) target = $region40
        $region39: #{tpu_custom_call.1} parent=27 // pred_region
          %s1306 = ssub.s32 768, 768
          %1307 = vsyncadd %s1298, %s1306
          %s1308 = smul.addr %s20, 6
          %s1309 = smul.addr %s1308, 128
          %s1310 = scalar_lea.hbm %s2, %s1309
          %s1311 = sshll.u32 %s1301, 4
          %s1312 = int_to_ptr.vmem [resolvable:$true] %s1311
          %1317 = dma.vmem_to_hbm [thread:$0]  %s1312, 768, %s1310, %s1298, 128, 128, 8
        $region40: #{tpu_custom_call.1} parent=27 // pred_fallthru
          _
      $region28: #{tpu_custom_call.1} parent=5 // pred_fallthru
        _
      %p1318 = scmp.le.s32.totalorder 2, %s15
      // Predicated region
      $region41: #{tpu_custom_call.1} parent=5 // pred_check
        %p1319 = pneg %p1318
      $region42: #{tpu_custom_call.1} parent=5 // pred_check_branch
        %1321 = sbr.rel (%p1319) target = $region44
      $region43: #{tpu_custom_call.1} parent=5 // pred_region
        %s1322 = ssub.s32 %s15, 2
        // Predicated region
        $region45: #{tpu_custom_call.1} parent=43 // pred_check
          %p1323 = pneg %p91
        $region46: #{tpu_custom_call.1} parent=43 // pred_check_branch
          %1325 = sbr.rel (%p1323) target = $region48
        $region47: #{tpu_custom_call.1} parent=43 // pred_region
          %s1326 = sand.u32 %s76, 1
          %s1327 = scalar_lea.sflag [#allocation5], %s1326
          %s1328 = sand.u32 %s76, 1
          %s1329 = smul.addr %s1328, 48
          %s1330 = scalar_lea.vmem [#allocation8], %s1329
          %1331 = dma.done %s1327, 768
        $region48: #{tpu_custom_call.1} parent=43 // pred_fallthru
          _
      $region44: #{tpu_custom_call.1} parent=5 // pred_fallthru
        _
    $region6: #{tpu_custom_call.1} parent=1 // loop_footer
      %s19 = sadd.s32 1, %s15
    $region7: #{tpu_custom_call.1} parent=1 // loop_footer_branch
      %14 = sbr.rel target = $region3
    $region8: #{tpu_custom_call.1} parent=1 // loop_exit
      _
    %1332 = vsyncpa [#allocation4], 1
    %s1333 = scalar_lea.sflag [#allocation4], 1
    %1334 = vsyncpa %s1333, 1
    %1335 = vsyncpa [#allocation7], 1
    %1336 = vsyncpa [#allocation5], 1
    %s1337 = scalar_lea.sflag [#allocation5], 1
    %1338 = vsyncpa %s1337, 1

</llo_original>
